<compile_context>
chip_gen: v5e
topology: v5e:2x2
jax: 0.10.0
libtpu: 0.0.40
codegen_flags: <defaults>
</compile_context>

<pallas_src>
import jax
import jax.numpy as jnp
from jax.experimental import pallas as pl
from jax.experimental.pallas import tpu as pltpu


def _round_up(x, m):
    return (x + m - 1) // m * m


# ----------------------------- parameter prep -------------------------------

def _prep_block_params(p, compute_dtype):
    """Pad channels to multiples of 128, fold conv taps into rows, cast weights."""
    w1, b1, w2, b2, wd, bd = p["w1"], p["b1"], p["w2"], p["b2"], p["wd"], p["bd"]
    K, cin, cout = w1.shape
    dilation = p["dilation"]
    pad = (K - 1) * dilation
    pad8 = _round_up(pad, 8) if pad > 0 else 0
    cin_p, cout_p = _round_up(cin, 128), _round_up(cout, 128)

    w1f = jnp.pad(w1, ((0, 0), (0, cin_p - cin), (0, cout_p - cout)))
    w1f = w1f.reshape(K * cin_p, cout_p).astype(compute_dtype)
    w2f = jnp.pad(w2, ((0, 0), (0, cout_p - cout), (0, cout_p - cout)))
    w2f = w2f.reshape(K * cout_p, cout_p).astype(compute_dtype)
    b1p = jnp.pad(b1, (0, cout_p - cout)).reshape(1, cout_p).astype(jnp.float32)
    b2p = jnp.pad(b2, (0, cout_p - cout)).reshape(1, cout_p).astype(jnp.float32)
    has_ds = wd is not None
    if has_ds:
        wdf = jnp.pad(wd[0], ((0, cin_p - cin), (0, cout_p - cout))).astype(compute_dtype)
        bdp = jnp.pad(bd, (0, cout_p - cout)).reshape(1, cout_p).astype(jnp.float32)
    else:
        wdf, bdp = None, None
    return dict(w1f=w1f, b1=b1p, w2f=w2f, b2=b2p, wdf=wdf, bd=bdp,
                K=K, dilation=dilation, pad=pad, pad8=pad8,
                cin_p=cin_p, cout_p=cout_p, has_ds=has_ds)


def _plan_tiles(L, c0_p, blocks, compute_dtype, target):
    """Pick the time tile TL (multiple of 8, <= target) and a scoped-VMEM limit."""
    isz = jnp.dtype(compute_dtype).itemsize

    def vmem_estimate(tl):
        total = 2 * tl * c0_p * isz                       # input block (2 buffers)
        total += 2 * tl * blocks[-1]["cout_p"] * 4        # f32 output block (2 buffers)
        for blk in blocks:
            w = blk["w1f"].size * isz + blk["w2f"].size * isz
            w += (blk["b1"].size + blk["b2"].size) * 4
            if blk["has_ds"]:
                w += blk["wdf"].size * isz + blk["bd"].size * 4
            total += 2 * w                                # conservative: x2 buffers
            if blk["pad"] > 0:                            # carry windows
                total += (blk["pad8"] + tl) * (blk["cin_p"] + blk["cout_p"]) * isz
            total += 4 * tl * blk["cout_p"] * 4           # f32 temporaries allowance
        return total

    TL = min(_round_up(L, 8), _round_up(target, 8))
    while TL > 128 and vmem_estimate(TL) > 40 * 2**20:    # stay well inside v7x VMEM
        TL = _round_up(TL // 2, 8)
    L_pad = _round_up(L, TL)
    vmem_limit = int(min(64 * 2**20, max(32 * 2**20, 2 * vmem_estimate(TL))))
    return TL, L_pad, vmem_limit


# ----------------------------- fused kernel ---------------------------------

def _make_tcn_kernel(cfgs, TL, compute_dtype):
    """Fused all-layer TCN kernel for one (batch, time-tile) grid point.

    Ref order:
      x_ref                         (1, TL, C0_p)      current input tile
      per layer: w1, b1, w2, b2[, wd, bd]              resident weights/biases
      out_ref                       (1, TL, Clast_p)
      per layer with pad>0: win1 (pad8+TL, Cin_p), win2 (pad8+TL, Cout_p)
    Window rows map to time as: row r <-> time r - pad8 (head = causal carry).
    """

    def advance_window(win, pad, pad8, body, first):
        # Carry the last `pad` rows (times [TL-pad, TL)) of the previous tile
        # into the head (times [-pad, 0)); zero the head on the first tile of a
        # batch; then store the current body at the sublane-aligned offset pad8.
        # Overlapping src/dst (pad > TL) is safe: the tail is read into a value
        # before the store.
        tail = win[pad8 + TL - pad: pad8 + TL, :]
        win[pad8 - pad: pad8, :] = tail

        @pl.when(first)
        def _():
            win[pad8 - pad: pad8, :] = jnp.zeros((pad, win.shape[1]), win.dtype)

        win[pad8: pad8 + TL, :] = body

    def causal_conv(win, pad, pad8, K, dil, cin_p, w_ref, b_ref):
        # out[t] = b + sum_k x[t + k*dil - pad] @ w[k]; per-tap MXU dots with
        # f32 accumulation (no lane-concat copies).
        acc = None
        for k in range(K):
            start = pad8 - pad + k * dil
            tap = win[start: start + TL, :]
            wk = w_ref[k * cin_p: (k + 1) * cin_p, :]
            d = jnp.dot(tap, wk, preferred_element_type=jnp.float32)
            acc = d if acc is None else acc + d
        return acc + b_ref[...]

    def kernel(*refs):
        it = iter(refs)
        x_ref = next(it)
        wrefs = [tuple(next(it) for _ in range(6 if c["has_ds"] else 4))
                 for c in cfgs]
        out_ref = next(it)
        winrefs = [(next(it), next(it)) if c["pad"] > 0 else (None, None)
                   for c in cfgs]

        first = pl.program_id(1) == 0          # first time tile of this batch row

        cur = x_ref[0]                         # (TL, C0_p), compute dtype
        cur_f32 = cur.astype(jnp.float32)      # residual path stays f32

        for cfg, w, (win1, win2) in zip(cfgs, wrefs, winrefs):
            K, dil = cfg["K"], cfg["dilation"]
            pad, pad8 = cfg["pad"], cfg["pad8"]
            cin_p, cout_p = cfg["cin_p"], cfg["cout_p"]
            if cfg["has_ds"]:
                w1, b1, w2, b2, wd, bd = w
            else:
                w1, b1, w2, b2 = w

            xin = cur

            # conv1 (causal, dilated) -> chomp -> ReLU   [dropout = identity]
            if pad > 0:
                advance_window(win1, pad, pad8, xin, first)
                h1 = causal_conv(win1, pad, pad8, K, dil, cin_p, w1, b1)
            else:                              # K == 1: plain 1x1 conv
                h1 = jnp.dot(xin, w1[...], preferred_element_type=jnp.float32) + b1[...]
            h1 = jnp.maximum(h1, 0.0)
            h1c = h1.astype(compute_dtype)

            # conv2 (causal, dilated) -> chomp -> ReLU   [dropout = identity]
            if pad > 0:
                advance_window(win2, pad, pad8, h1c, first)
                h2 = causal_conv(win2, pad, pad8, K, dil, cout_p, w2, b2)
            else:
                h2 = jnp.dot(h1c, w2[...], preferred_element_type=jnp.float32) + b2[...]
            h2 = jnp.maximum(h2, 0.0)

            # residual (1x1 conv iff Cin != Cout) + final ReLU
            if cfg["has_ds"]:
                res = jnp.dot(xin, wd[...], preferred_element_type=jnp.float32) + bd[...]
            else:
                res = cur_f32
            cur_f32 = jnp.maximum(h2 + res, 0.0)
            cur = cur_f32.astype(compute_dtype)

        out_ref[0] = cur_f32.astype(out_ref.dtype)

    return kernel


def tcn_forward(x_ncl, params_list, compute_dtype=jnp.bfloat16, time_tile=1024):
    """TemporalConvNet forward.  x_ncl: [B, C, L] (PyTorch NCL layout).

    All TemporalBlocks run inside a single fused pallas_call; inter-layer
    activations for the current time tile live only in VMEM and each conv's
    causal left context is carried across time tiles in VMEM scratch.
    Dropout layers are identity (inference semantics).  Pass
    compute_dtype=jnp.float32 for a bit-closer match to the f32 reference.
    """
    B, C0, L = x_ncl.shape
    blocks = [_prep_block_params(p, compute_dtype) for p in params_list]
    cfgs = [{k: blk[k] for k in
             ("K", "dilation", "pad", "pad8", "cin_p", "cout_p", "has_ds")}
            for blk in blocks]

    c0_p = _round_up(C0, 128)
    TL, L_pad, vmem_limit = _plan_tiles(L, c0_p, blocks, compute_dtype, time_tile)
    n_lt = L_pad // TL

    # NCL -> NLC; zero-pad channels to 128 lanes and time to a multiple of TL.
    # Padded channels stay exactly zero through every block (zero weights/bias)
    # and padded time rows never influence valid rows (causal convs).
    x = jnp.transpose(x_ncl, (0, 2, 1))
    x = jnp.pad(x, ((0, 0), (0, L_pad - L), (0, c0_p - C0))).astype(compute_dtype)

    const = lambda b, i: (0, 0)        # resident weights: block index never changes
    in_specs = [pl.BlockSpec((1, TL, c0_p), lambda b, i: (b, i, 0))]
    args = [x]
    for blk in blocks:
        in_specs += [pl.BlockSpec(blk["w1f"].shape, const),
                     pl.BlockSpec(blk["b1"].shape, const),
                     pl.BlockSpec(blk["w2f"].shape, const),
                     pl.BlockSpec(blk["b2"].shape, const)]
        args += [blk["w1f"], blk["b1"], blk["w2f"], blk["b2"]]
        if blk["has_ds"]:
            in_specs += [pl.BlockSpec(blk["wdf"].shape, const),
                         pl.BlockSpec(blk["bd"].shape, const)]
            args += [blk["wdf"], blk["bd"]]

    # Per-layer causal carry windows (persist across time tiles of a batch row).
    scratch_shapes = []
    for blk in blocks:
        if blk["pad"] > 0:
            scratch_shapes.append(
                pltpu.VMEM((blk["pad8"] + TL, blk["cin_p"]), compute_dtype))
            scratch_shapes.append(
                pltpu.VMEM((blk["pad8"] + TL, blk["cout_p"]), compute_dtype))

    c_last_p = blocks[-1]["cout_p"]
    out = pl.pallas_call(
        _make_tcn_kernel(cfgs, TL, compute_dtype),
        out_shape=jax.ShapeDtypeStruct((B, L_pad, c_last_p), x_ncl.dtype),
        grid=(B, n_lt),
        in_specs=in_specs,
        out_specs=pl.BlockSpec((1, TL, c_last_p), lambda b, i: (b, i, 0)),
        scratch_shapes=scratch_shapes,
        # Time axis carries causal state -> "arbitrary"; batch is "parallel"
        # (feeds both TensorCores on v7x when B >= 2).
        compiler_params=pltpu.CompilerParams(
            dimension_semantics=("parallel", "arbitrary"),
            vmem_limit_bytes=vmem_limit),
    )(*args)

    c_last = params_list[-1]["w1"].shape[-1]
    return jnp.transpose(out[:, :L, :c_last], (0, 2, 1))


# ----------------------------- pure-JAX reference ---------------------------

def _ref_causal_conv(x_blc, w_kio, b, dilation):
    B, L, _ = x_blc.shape
    K = w_kio.shape[0]
    pad = (K - 1) * dilation
    xp = jnp.pad(x_blc, ((0, 0), (pad, 0), (0, 0)))
    out = jnp.zeros((B, L, w_kio.shape[-1]), jnp.float32) + b
    for k in range(K):
        out = out + jnp.einsum("blc,co->blo",
                               xp[:, k * dilation:k * dilation + L, :], w_kio[k])
    return out


def tcn_reference(x_ncl, params_list):
    x = jnp.transpose(x_ncl, (0, 2, 1)).astype(jnp.float32)
    for p in params_list:
        h = jax.nn.relu(_ref_causal_conv(x, p["w1"], p["b1"], p["dilation"]))
        h = jax.nn.relu(_ref_causal_conv(h, p["w2"], p["b2"], p["dilation"]))
        res = x if p["wd"] is None else _ref_causal_conv(x, p["wd"], p["bd"], 1)
        x = jax.nn.relu(h + res)
    return jnp.transpose(x, (0, 2, 1))


# ----------------------------- params / demo --------------------------------

def init_tcn_params(key, num_inputs, num_channels, kernel_size=2):
    """Deterministic synthetic params (matching init_weights: N(0, 0.01))."""
    params_list = []
    cin = num_inputs
    for i, cout in enumerate(num_channels):
        key, k1, k2, k3, k4, k5, k6 = jax.random.split(key, 7)
        w1 = 0.01 * jax.random.normal(k1, (kernel_size, cin, cout), jnp.float32)
        b1 = 0.01 * jax.random.normal(k2, (cout,), jnp.float32)
        w2 = 0.01 * jax.random.normal(k3, (kernel_size, cout, cout), jnp.float32)
        b2 = 0.01 * jax.random.normal(k4, (cout,), jnp.float32)
        if cin != cout:
            wd = 0.01 * jax.random.normal(k5, (1, cin, cout), jnp.float32)
            bd = 0.01 * jax.random.normal(k6, (cout,), jnp.float32)
        else:
            wd, bd = None, None
        params_list.append(dict(w1=w1, b1=b1, w2=w2, b2=b2, wd=wd, bd=bd,
                                dilation=2 ** i))
        cin = cout
    return key, params_list


if __name__ == "__main__":
    key = jax.random.PRNGKey(0)

    # --- test 1: small shapes, single time tile ------------------------------
    B, num_inputs, L = 2, 4, 16
    num_channels = [8, 8, 16]
    key, params = init_tcn_params(key, num_inputs, num_channels, kernel_size=2)
    key, xk = jax.random.split(key)
    x = jax.random.normal(xk, (B, num_inputs, L), jnp.float32)      # NCL

    out = tcn_forward(x, params)                                    # bf16 compute
    jax.block_until_ready(out)
    assert out.shape == (B, num_channels[-1], L), out.shape
    ref = tcn_reference(x, params)
    err = float(jnp.max(jnp.abs(out - ref)))
    assert jnp.allclose(out, ref, rtol=0.1, atol=2e-3), err

    out32 = tcn_forward(x, params, compute_dtype=jnp.float32)       # parity path
    jax.block_until_ready(out32)
    err32 = float(jnp.max(jnp.abs(out32 - ref)))
    assert jnp.allclose(out32, ref, rtol=2e-2, atol=1e-3), err32

    # --- test 2: multiple time tiles -> exercises the VMEM-carried causal
    # state, including a layer whose receptive-field pad exceeds the tile. ----
    B2, L2 = 2, 40
    num_channels2 = [8, 8, 16, 16, 8]                 # dilations 1, 2, 4, 8, 16
    key, params2 = init_tcn_params(key, num_inputs, num_channels2, kernel_size=2)
    key, xk2 = jax.random.split(key)
    x2 = jax.random.normal(xk2, (B2, num_inputs, L2), jnp.float32)

    out2 = tcn_forward(x2, params2, time_tile=8)      # TL=8 -> 5 time tiles
    jax.block_until_ready(out2)
    ref2 = tcn_reference(x2, params2)
    err2 = float(jnp.max(jnp.abs(out2 - ref2)))
    assert jnp.allclose(out2, ref2, rtol=0.1, atol=2e-3), err2

    print("KERNEL_OK")
</pallas_src>

<mosaic_0001>
module attributes {stable_mosaic.version = 11 : i64} {
  func.func @kernel(%arg0: i32, %arg1: i32, %arg2: memref<1x16x128xbf16, #tpu.memory_space<vmem>>, %arg3: memref<256x128xbf16, #tpu.memory_space<vmem>>, %arg4: memref<1x128xf32, #tpu.memory_space<vmem>>, %arg5: memref<256x128xbf16, #tpu.memory_space<vmem>>, %arg6: memref<1x128xf32, #tpu.memory_space<vmem>>, %arg7: memref<128x128xbf16, #tpu.memory_space<vmem>>, %arg8: memref<1x128xf32, #tpu.memory_space<vmem>>, %arg9: memref<256x128xbf16, #tpu.memory_space<vmem>>, %arg10: memref<1x128xf32, #tpu.memory_space<vmem>>, %arg11: memref<256x128xbf16, #tpu.memory_space<vmem>>, %arg12: memref<1x128xf32, #tpu.memory_space<vmem>>, %arg13: memref<256x128xbf16, #tpu.memory_space<vmem>>, %arg14: memref<1x128xf32, #tpu.memory_space<vmem>>, %arg15: memref<256x128xbf16, #tpu.memory_space<vmem>>, %arg16: memref<1x128xf32, #tpu.memory_space<vmem>>, %arg17: memref<128x128xbf16, #tpu.memory_space<vmem>>, %arg18: memref<1x128xf32, #tpu.memory_space<vmem>>, %arg19: memref<1x16x128xf32, #tpu.memory_space<vmem>>, %arg20: memref<24x128xbf16, #tpu.memory_space<vmem>>, %arg21: memref<24x128xbf16, #tpu.memory_space<vmem>>, %arg22: memref<24x128xbf16, #tpu.memory_space<vmem>>, %arg23: memref<24x128xbf16, #tpu.memory_space<vmem>>, %arg24: memref<24x128xbf16, #tpu.memory_space<vmem>>, %arg25: memref<24x128xbf16, #tpu.memory_space<vmem>>) attributes {dimension_semantics = [#tpu.dimension_semantics<parallel>, #tpu.dimension_semantics<arbitrary>], iteration_bounds = array<i64: 2, 1>, scalar_prefetch = 0 : i64, scratch_operands = 6 : i64, tpu.core_type = #tpu.core_type<tc>, window_params = [{transform_indices = @transform_0, window_bounds = array<i64: 1, 16, 128>}, {pipeline_mode = #tpu.pipeline_mode<synchronous>, transform_indices = @transform_1, window_bounds = array<i64: 256, 128>}, {pipeline_mode = #tpu.pipeline_mode<synchronous>, transform_indices = @transform_2, window_bounds = array<i64: 1, 128>}, {pipeline_mode = #tpu.pipeline_mode<synchronous>, transform_indices = @transform_3, window_bounds = array<i64: 256, 128>}, {pipeline_mode = #tpu.pipeline_mode<synchronous>, transform_indices = @transform_4, window_bounds = array<i64: 1, 128>}, {pipeline_mode = #tpu.pipeline_mode<synchronous>, transform_indices = @transform_5, window_bounds = array<i64: 128, 128>}, {pipeline_mode = #tpu.pipeline_mode<synchronous>, transform_indices = @transform_6, window_bounds = array<i64: 1, 128>}, {pipeline_mode = #tpu.pipeline_mode<synchronous>, transform_indices = @transform_7, window_bounds = array<i64: 256, 128>}, {pipeline_mode = #tpu.pipeline_mode<synchronous>, transform_indices = @transform_8, window_bounds = array<i64: 1, 128>}, {pipeline_mode = #tpu.pipeline_mode<synchronous>, transform_indices = @transform_9, window_bounds = array<i64: 256, 128>}, {pipeline_mode = #tpu.pipeline_mode<synchronous>, transform_indices = @transform_10, window_bounds = array<i64: 1, 128>}, {pipeline_mode = #tpu.pipeline_mode<synchronous>, transform_indices = @transform_11, window_bounds = array<i64: 256, 128>}, {pipeline_mode = #tpu.pipeline_mode<synchronous>, transform_indices = @transform_12, window_bounds = array<i64: 1, 128>}, {pipeline_mode = #tpu.pipeline_mode<synchronous>, transform_indices = @transform_13, window_bounds = array<i64: 256, 128>}, {pipeline_mode = #tpu.pipeline_mode<synchronous>, transform_indices = @transform_14, window_bounds = array<i64: 1, 128>}, {pipeline_mode = #tpu.pipeline_mode<synchronous>, transform_indices = @transform_15, window_bounds = array<i64: 128, 128>}, {pipeline_mode = #tpu.pipeline_mode<synchronous>, transform_indices = @transform_16, window_bounds = array<i64: 1, 128>}, {transform_indices = @transform_17, window_bounds = array<i64: 1, 16, 128>}]} {
    %c0_i32 = arith.constant 0 : i32
    %0 = arith.cmpi eq, %arg1, %c0_i32 : i32
    %c0 = arith.constant 0 : index
    %c0_0 = arith.constant 0 : index
    %c0_1 = arith.constant 0 : index
    %1 = vector.load %arg2[%c0, %c0_0, %c0_1] : memref<1x16x128xbf16, #tpu.memory_space<vmem>>, vector<1x16x128xbf16>
    %2 = vector.shape_cast %1 : vector<1x16x128xbf16> to vector<16x128xbf16>
    %c23 = arith.constant 23 : index
    %c0_2 = arith.constant 0 : index
    %3 = vector.load %arg20[%c23, %c0_2] : memref<24x128xbf16, #tpu.memory_space<vmem>>, vector<1x128xbf16>
    %c7 = arith.constant 7 : index
    %c0_3 = arith.constant 0 : index
    %4 = vector.load %arg20[%c7, %c0_3] : memref<24x128xbf16, #tpu.memory_space<vmem>>, vector<1x128xbf16>
    tpu.vector_store %arg20[%c7, %c0_3], %3 {strides = array<i32>} : memref<24x128xbf16, #tpu.memory_space<vmem>>, vector<1x128xbf16>,
    %5 = arith.extui %0 : i1 to i32
    %c0_i32_4 = arith.constant 0 : i32
    %6 = arith.cmpi ne, %5, %c0_i32_4 : i32
    scf.if %6 {
      %cst_129 = arith.constant 0.000000e+00 : bf16
      %132 = vector.broadcast %cst_129 : bf16 to vector<1x128xbf16>
      %c7_130 = arith.constant 7 : index
      %c0_131 = arith.constant 0 : index
      %133 = vector.load %arg20[%c7_130, %c0_131] : memref<24x128xbf16, #tpu.memory_space<vmem>>, vector<1x128xbf16>
      tpu.vector_store %arg20[%c7_130, %c0_131], %132 {strides = array<i32>} : memref<24x128xbf16, #tpu.memory_space<vmem>>, vector<1x128xbf16>,
    } else {
    }
    %c8 = arith.constant 8 : index
    %c0_5 = arith.constant 0 : index
    %7 = vector.load %arg20[%c8, %c0_5] : memref<24x128xbf16, #tpu.memory_space<vmem>>, vector<16x128xbf16>
    tpu.vector_store %arg20[%c8, %c0_5], %2 {strides = array<i32>} : memref<24x128xbf16, #tpu.memory_space<vmem>>, vector<16x128xbf16>,
    %c7_6 = arith.constant 7 : index
    %c0_7 = arith.constant 0 : index
    %8 = vector.load %arg20[%c7_6, %c0_7] : memref<24x128xbf16, #tpu.memory_space<vmem>>, vector<16x128xbf16>
    %c0_8 = arith.constant 0 : index
    %c0_9 = arith.constant 0 : index
    %9 = vector.load %arg3[%c0_8, %c0_9] : memref<256x128xbf16, #tpu.memory_space<vmem>>, vector<128x128xbf16>
    %cst = arith.constant dense<0.000000e+00> : vector<16x128xf32>
    %10 = tpu.matmul %8, %9, %cst {dimension_numbers = #tpu.dot_dimension_numbers<[1], [0], [0], [1], [0, 0, 1, 1], [], []>} : vector<16x128xbf16>, vector<128x128xbf16>, vector<16x128xf32> -> vector<16x128xf32>
    %c8_10 = arith.constant 8 : index
    %c0_11 = arith.constant 0 : index
    %11 = vector.load %arg20[%c8_10, %c0_11] : memref<24x128xbf16, #tpu.memory_space<vmem>>, vector<16x128xbf16>
    %c128 = arith.constant 128 : index
    %c0_12 = arith.constant 0 : index
    %12 = vector.load %arg3[%c128, %c0_12] : memref<256x128xbf16, #tpu.memory_space<vmem>>, vector<128x128xbf16>
    %cst_13 = arith.constant dense<0.000000e+00> : vector<16x128xf32>
    %13 = tpu.matmul %11, %12, %cst_13 {dimension_numbers = #tpu.dot_dimension_numbers<[1], [0], [0], [1], [0, 0, 1, 1], [], []>} : vector<16x128xbf16>, vector<128x128xbf16>, vector<16x128xf32> -> vector<16x128xf32>
    %14 = arith.addf %10, %13 : vector<16x128xf32>
    %c0_14 = arith.constant 0 : index
    %c0_15 = arith.constant 0 : index
    %15 = vector.load %arg4[%c0_14, %c0_15] : memref<1x128xf32, #tpu.memory_space<vmem>>, vector<1x128xf32>
    %16 = vector.broadcast %15 : vector<1x128xf32> to vector<16x128xf32>
    %17 = arith.addf %14, %16 : vector<16x128xf32>
    %cst_16 = arith.constant 0.000000e+00 : f32
    %18 = vector.broadcast %cst_16 : f32 to vector<16x128xf32>
    %19 = arith.maximumf %17, %18 : vector<16x128xf32>
    %20 = arith.truncf %19 : vector<16x128xf32> to vector<16x128xbf16>
    %c23_17 = arith.constant 23 : index
    %c0_18 = arith.constant 0 : index
    %21 = vector.load %arg21[%c23_17, %c0_18] : memref<24x128xbf16, #tpu.memory_space<vmem>>, vector<1x128xbf16>
    %c7_19 = arith.constant 7 : index
    %c0_20 = arith.constant 0 : index
    %22 = vector.load %arg21[%c7_19, %c0_20] : memref<24x128xbf16, #tpu.memory_space<vmem>>, vector<1x128xbf16>
    tpu.vector_store %arg21[%c7_19, %c0_20], %21 {strides = array<i32>} : memref<24x128xbf16, #tpu.memory_space<vmem>>, vector<1x128xbf16>,
    %23 = arith.extui %0 : i1 to i32
    %c0_i32_21 = arith.constant 0 : i32
    %24 = arith.cmpi ne, %23, %c0_i32_21 : i32
    scf.if %24 {
      %cst_129 = arith.constant 0.000000e+00 : bf16
      %132 = vector.broadcast %cst_129 : bf16 to vector<1x128xbf16>
      %c7_130 = arith.constant 7 : index
      %c0_131 = arith.constant 0 : index
      %133 = vector.load %arg21[%c7_130, %c0_131] : memref<24x128xbf16, #tpu.memory_space<vmem>>, vector<1x128xbf16>
      tpu.vector_store %arg21[%c7_130, %c0_131], %132 {strides = array<i32>} : memref<24x128xbf16, #tpu.memory_space<vmem>>, vector<1x128xbf16>,
    } else {
    }
    %c8_22 = arith.constant 8 : index
    %c0_23 = arith.constant 0 : index
    %25 = vector.load %arg21[%c8_22, %c0_23] : memref<24x128xbf16, #tpu.memory_space<vmem>>, vector<16x128xbf16>
    tpu.vector_store %arg21[%c8_22, %c0_23], %20 {strides = array<i32>} : memref<24x128xbf16, #tpu.memory_space<vmem>>, vector<16x128xbf16>,
    %c7_24 = arith.constant 7 : index
    %c0_25 = arith.constant 0 : index
    %26 = vector.load %arg21[%c7_24, %c0_25] : memref<24x128xbf16, #tpu.memory_space<vmem>>, vector<16x128xbf16>
    %c0_26 = arith.constant 0 : index
    %c0_27 = arith.constant 0 : index
    %27 = vector.load %arg5[%c0_26, %c0_27] : memref<256x128xbf16, #tpu.memory_space<vmem>>, vector<128x128xbf16>
    %cst_28 = arith.constant dense<0.000000e+00> : vector<16x128xf32>
    %28 = tpu.matmul %26, %27, %cst_28 {dimension_numbers = #tpu.dot_dimension_numbers<[1], [0], [0], [1], [0, 0, 1, 1], [], []>} : vector<16x128xbf16>, vector<128x128xbf16>, vector<16x128xf32> -> vector<16x128xf32>
    %c8_29 = arith.constant 8 : index
    %c0_30 = arith.constant 0 : index
    %29 = vector.load %arg21[%c8_29, %c0_30] : memref<24x128xbf16, #tpu.memory_space<vmem>>, vector<16x128xbf16>
    %c128_31 = arith.constant 128 : index
    %c0_32 = arith.constant 0 : index
    %30 = vector.load %arg5[%c128_31, %c0_32] : memref<256x128xbf16, #tpu.memory_space<vmem>>, vector<128x128xbf16>
    %cst_33 = arith.constant dense<0.000000e+00> : vector<16x128xf32>
    %31 = tpu.matmul %29, %30, %cst_33 {dimension_numbers = #tpu.dot_dimension_numbers<[1], [0], [0], [1], [0, 0, 1, 1], [], []>} : vector<16x128xbf16>, vector<128x128xbf16>, vector<16x128xf32> -> vector<16x128xf32>
    %32 = arith.addf %28, %31 : vector<16x128xf32>
    %c0_34 = arith.constant 0 : index
    %c0_35 = arith.constant 0 : index
    %33 = vector.load %arg6[%c0_34, %c0_35] : memref<1x128xf32, #tpu.memory_space<vmem>>, vector<1x128xf32>
    %34 = vector.broadcast %33 : vector<1x128xf32> to vector<16x128xf32>
    %35 = arith.addf %32, %34 : vector<16x128xf32>
    %cst_36 = arith.constant 0.000000e+00 : f32
    %36 = vector.broadcast %cst_36 : f32 to vector<16x128xf32>
    %37 = arith.maximumf %35, %36 : vector<16x128xf32>
    %c0_37 = arith.constant 0 : index
    %c0_38 = arith.constant 0 : index
    %38 = vector.load %arg7[%c0_37, %c0_38] : memref<128x128xbf16, #tpu.memory_space<vmem>>, vector<128x128xbf16>
    %cst_39 = arith.constant dense<0.000000e+00> : vector<16x128xf32>
    %39 = tpu.matmul %2, %38, %cst_39 {dimension_numbers = #tpu.dot_dimension_numbers<[1], [0], [0], [1], [0, 0, 1, 1], [], []>} : vector<16x128xbf16>, vector<128x128xbf16>, vector<16x128xf32> -> vector<16x128xf32>
    %c0_40 = arith.constant 0 : index
    %c0_41 = arith.constant 0 : index
    %40 = vector.load %arg8[%c0_40, %c0_41] : memref<1x128xf32, #tpu.memory_space<vmem>>, vector<1x128xf32>
    %41 = vector.broadcast %40 : vector<1x128xf32> to vector<16x128xf32>
    %42 = arith.addf %39, %41 : vector<16x128xf32>
    %43 = arith.addf %37, %42 : vector<16x128xf32>
    %cst_42 = arith.constant 0.000000e+00 : f32
    %44 = vector.broadcast %cst_42 : f32 to vector<16x128xf32>
    %45 = arith.maximumf %43, %44 : vector<16x128xf32>
    %46 = arith.truncf %45 : vector<16x128xf32> to vector<16x128xbf16>
    %c22 = arith.constant 22 : index
    %c0_43 = arith.constant 0 : index
    %47 = vector.load %arg22[%c22, %c0_43] : memref<24x128xbf16, #tpu.memory_space<vmem>>, vector<2x128xbf16>
    %c6 = arith.constant 6 : index
    %c0_44 = arith.constant 0 : index
    %48 = vector.load %arg22[%c6, %c0_44] : memref<24x128xbf16, #tpu.memory_space<vmem>>, vector<2x128xbf16>
    tpu.vector_store %arg22[%c6, %c0_44], %47 {strides = array<i32>} : memref<24x128xbf16, #tpu.memory_space<vmem>>, vector<2x128xbf16>,
    %49 = arith.extui %0 : i1 to i32
    %c0_i32_45 = arith.constant 0 : i32
    %50 = arith.cmpi ne, %49, %c0_i32_45 : i32
    scf.if %50 {
      %cst_129 = arith.constant 0.000000e+00 : bf16
      %132 = vector.broadcast %cst_129 : bf16 to vector<2x128xbf16>
      %c6_130 = arith.constant 6 : index
      %c0_131 = arith.constant 0 : index
      %133 = vector.load %arg22[%c6_130, %c0_131] : memref<24x128xbf16, #tpu.memory_space<vmem>>, vector<2x128xbf16>
      tpu.vector_store %arg22[%c6_130, %c0_131], %132 {strides = array<i32>} : memref<24x128xbf16, #tpu.memory_space<vmem>>, vector<2x128xbf16>,
    } else {
    }
    %c8_46 = arith.constant 8 : index
    %c0_47 = arith.constant 0 : index
    %51 = vector.load %arg22[%c8_46, %c0_47] : memref<24x128xbf16, #tpu.memory_space<vmem>>, vector<16x128xbf16>
    tpu.vector_store %arg22[%c8_46, %c0_47], %46 {strides = array<i32>} : memref<24x128xbf16, #tpu.memory_space<vmem>>, vector<16x128xbf16>,
    %c6_48 = arith.constant 6 : index
    %c0_49 = arith.constant 0 : index
    %52 = vector.load %arg22[%c6_48, %c0_49] : memref<24x128xbf16, #tpu.memory_space<vmem>>, vector<16x128xbf16>
    %c0_50 = arith.constant 0 : index
    %c0_51 = arith.constant 0 : index
    %53 = vector.load %arg9[%c0_50, %c0_51] : memref<256x128xbf16, #tpu.memory_space<vmem>>, vector<128x128xbf16>
    %cst_52 = arith.constant dense<0.000000e+00> : vector<16x128xf32>
    %54 = tpu.matmul %52, %53, %cst_52 {dimension_numbers = #tpu.dot_dimension_numbers<[1], [0], [0], [1], [0, 0, 1, 1], [], []>} : vector<16x128xbf16>, vector<128x128xbf16>, vector<16x128xf32> -> vector<16x128xf32>
    %c8_53 = arith.constant 8 : index
    %c0_54 = arith.constant 0 : index
    %55 = vector.load %arg22[%c8_53, %c0_54] : memref<24x128xbf16, #tpu.memory_space<vmem>>, vector<16x128xbf16>
    %c128_55 = arith.constant 128 : index
    %c0_56 = arith.constant 0 : index
    %56 = vector.load %arg9[%c128_55, %c0_56] : memref<256x128xbf16, #tpu.memory_space<vmem>>, vector<128x128xbf16>
    %cst_57 = arith.constant dense<0.000000e+00> : vector<16x128xf32>
    %57 = tpu.matmul %55, %56, %cst_57 {dimension_numbers = #tpu.dot_dimension_numbers<[1], [0], [0], [1], [0, 0, 1, 1], [], []>} : vector<16x128xbf16>, vector<128x128xbf16>, vector<16x128xf32> -> vector<16x128xf32>
    %58 = arith.addf %54, %57 : vector<16x128xf32>
    %c0_58 = arith.constant 0 : index
    %c0_59 = arith.constant 0 : index
    %59 = vector.load %arg10[%c0_58, %c0_59] : memref<1x128xf32, #tpu.memory_space<vmem>>, vector<1x128xf32>
    %60 = vector.broadcast %59 : vector<1x128xf32> to vector<16x128xf32>
    %61 = arith.addf %58, %60 : vector<16x128xf32>
    %cst_60 = arith.constant 0.000000e+00 : f32
    %62 = vector.broadcast %cst_60 : f32 to vector<16x128xf32>
    %63 = arith.maximumf %61, %62 : vector<16x128xf32>
    %64 = arith.truncf %63 : vector<16x128xf32> to vector<16x128xbf16>
    %c22_61 = arith.constant 22 : index
    %c0_62 = arith.constant 0 : index
    %65 = vector.load %arg23[%c22_61, %c0_62] : memref<24x128xbf16, #tpu.memory_space<vmem>>, vector<2x128xbf16>
    %c6_63 = arith.constant 6 : index
    %c0_64 = arith.constant 0 : index
    %66 = vector.load %arg23[%c6_63, %c0_64] : memref<24x128xbf16, #tpu.memory_space<vmem>>, vector<2x128xbf16>
    tpu.vector_store %arg23[%c6_63, %c0_64], %65 {strides = array<i32>} : memref<24x128xbf16, #tpu.memory_space<vmem>>, vector<2x128xbf16>,
    %67 = arith.extui %0 : i1 to i32
    %c0_i32_65 = arith.constant 0 : i32
    %68 = arith.cmpi ne, %67, %c0_i32_65 : i32
    scf.if %68 {
      %cst_129 = arith.constant 0.000000e+00 : bf16
      %132 = vector.broadcast %cst_129 : bf16 to vector<2x128xbf16>
      %c6_130 = arith.constant 6 : index
      %c0_131 = arith.constant 0 : index
      %133 = vector.load %arg23[%c6_130, %c0_131] : memref<24x128xbf16, #tpu.memory_space<vmem>>, vector<2x128xbf16>
      tpu.vector_store %arg23[%c6_130, %c0_131], %132 {strides = array<i32>} : memref<24x128xbf16, #tpu.memory_space<vmem>>, vector<2x128xbf16>,
    } else {
    }
    %c8_66 = arith.constant 8 : index
    %c0_67 = arith.constant 0 : index
    %69 = vector.load %arg23[%c8_66, %c0_67] : memref<24x128xbf16, #tpu.memory_space<vmem>>, vector<16x128xbf16>
    tpu.vector_store %arg23[%c8_66, %c0_67], %64 {strides = array<i32>} : memref<24x128xbf16, #tpu.memory_space<vmem>>, vector<16x128xbf16>,
    %c6_68 = arith.constant 6 : index
    %c0_69 = arith.constant 0 : index
    %70 = vector.load %arg23[%c6_68, %c0_69] : memref<24x128xbf16, #tpu.memory_space<vmem>>, vector<16x128xbf16>
    %c0_70 = arith.constant 0 : index
    %c0_71 = arith.constant 0 : index
    %71 = vector.load %arg11[%c0_70, %c0_71] : memref<256x128xbf16, #tpu.memory_space<vmem>>, vector<128x128xbf16>
    %cst_72 = arith.constant dense<0.000000e+00> : vector<16x128xf32>
    %72 = tpu.matmul %70, %71, %cst_72 {dimension_numbers = #tpu.dot_dimension_numbers<[1], [0], [0], [1], [0, 0, 1, 1], [], []>} : vector<16x128xbf16>, vector<128x128xbf16>, vector<16x128xf32> -> vector<16x128xf32>
    %c8_73 = arith.constant 8 : index
    %c0_74 = arith.constant 0 : index
    %73 = vector.load %arg23[%c8_73, %c0_74] : memref<24x128xbf16, #tpu.memory_space<vmem>>, vector<16x128xbf16>
    %c128_75 = arith.constant 128 : index
    %c0_76 = arith.constant 0 : index
    %74 = vector.load %arg11[%c128_75, %c0_76] : memref<256x128xbf16, #tpu.memory_space<vmem>>, vector<128x128xbf16>
    %cst_77 = arith.constant dense<0.000000e+00> : vector<16x128xf32>
    %75 = tpu.matmul %73, %74, %cst_77 {dimension_numbers = #tpu.dot_dimension_numbers<[1], [0], [0], [1], [0, 0, 1, 1], [], []>} : vector<16x128xbf16>, vector<128x128xbf16>, vector<16x128xf32> -> vector<16x128xf32>
    %76 = arith.addf %72, %75 : vector<16x128xf32>
    %c0_78 = arith.constant 0 : index
    %c0_79 = arith.constant 0 : index
    %77 = vector.load %arg12[%c0_78, %c0_79] : memref<1x128xf32, #tpu.memory_space<vmem>>, vector<1x128xf32>
    %78 = vector.broadcast %77 : vector<1x128xf32> to vector<16x128xf32>
    %79 = arith.addf %76, %78 : vector<16x128xf32>
    %cst_80 = arith.constant 0.000000e+00 : f32
    %80 = vector.broadcast %cst_80 : f32 to vector<16x128xf32>
    %81 = arith.maximumf %79, %80 : vector<16x128xf32>
    %82 = arith.addf %81, %45 : vector<16x128xf32>
    %cst_81 = arith.constant 0.000000e+00 : f32
    %83 = vector.broadcast %cst_81 : f32 to vector<16x128xf32>
    %84 = arith.maximumf %82, %83 : vector<16x128xf32>
    %85 = arith.truncf %84 : vector<16x128xf32> to vector<16x128xbf16>
    %c20 = arith.constant 20 : index
    %c0_82 = arith.constant 0 : index
    %86 = vector.load %arg24[%c20, %c0_82] : memref<24x128xbf16, #tpu.memory_space<vmem>>, vector<4x128xbf16>
    %c4 = arith.constant 4 : index
    %c0_83 = arith.constant 0 : index
    %87 = vector.load %arg24[%c4, %c0_83] : memref<24x128xbf16, #tpu.memory_space<vmem>>, vector<4x128xbf16>
    tpu.vector_store %arg24[%c4, %c0_83], %86 {strides = array<i32>} : memref<24x128xbf16, #tpu.memory_space<vmem>>, vector<4x128xbf16>,
    %88 = arith.extui %0 : i1 to i32
    %c0_i32_84 = arith.constant 0 : i32
    %89 = arith.cmpi ne, %88, %c0_i32_84 : i32
    scf.if %89 {
      %cst_129 = arith.constant 0.000000e+00 : bf16
      %132 = vector.broadcast %cst_129 : bf16 to vector<4x128xbf16>
      %c4_130 = arith.constant 4 : index
      %c0_131 = arith.constant 0 : index
      %133 = vector.load %arg24[%c4_130, %c0_131] : memref<24x128xbf16, #tpu.memory_space<vmem>>, vector<4x128xbf16>
      tpu.vector_store %arg24[%c4_130, %c0_131], %132 {strides = array<i32>} : memref<24x128xbf16, #tpu.memory_space<vmem>>, vector<4x128xbf16>,
    } else {
    }
    %c8_85 = arith.constant 8 : index
    %c0_86 = arith.constant 0 : index
    %90 = vector.load %arg24[%c8_85, %c0_86] : memref<24x128xbf16, #tpu.memory_space<vmem>>, vector<16x128xbf16>
    tpu.vector_store %arg24[%c8_85, %c0_86], %85 {strides = array<i32>} : memref<24x128xbf16, #tpu.memory_space<vmem>>, vector<16x128xbf16>,
    %c4_87 = arith.constant 4 : index
    %c0_88 = arith.constant 0 : index
    %91 = vector.load %arg24[%c4_87, %c0_88] : memref<24x128xbf16, #tpu.memory_space<vmem>>, vector<16x128xbf16>
    %c0_89 = arith.constant 0 : index
    %c0_90 = arith.constant 0 : index
    %92 = vector.load %arg13[%c0_89, %c0_90] : memref<256x128xbf16, #tpu.memory_space<vmem>>, vector<128x128xbf16>
    %cst_91 = arith.constant dense<0.000000e+00> : vector<16x128xf32>
    %93 = tpu.matmul %91, %92, %cst_91 {dimension_numbers = #tpu.dot_dimension_numbers<[1], [0], [0], [1], [0, 0, 1, 1], [], []>} : vector<16x128xbf16>, vector<128x128xbf16>, vector<16x128xf32> -> vector<16x128xf32>
    %c8_92 = arith.constant 8 : index
    %c0_93 = arith.constant 0 : index
    %94 = vector.load %arg24[%c8_92, %c0_93] : memref<24x128xbf16, #tpu.memory_space<vmem>>, vector<16x128xbf16>
    %c128_94 = arith.constant 128 : index
    %c0_95 = arith.constant 0 : index
    %95 = vector.load %arg13[%c128_94, %c0_95] : memref<256x128xbf16, #tpu.memory_space<vmem>>, vector<128x128xbf16>
    %cst_96 = arith.constant dense<0.000000e+00> : vector<16x128xf32>
    %96 = tpu.matmul %94, %95, %cst_96 {dimension_numbers = #tpu.dot_dimension_numbers<[1], [0], [0], [1], [0, 0, 1, 1], [], []>} : vector<16x128xbf16>, vector<128x128xbf16>, vector<16x128xf32> -> vector<16x128xf32>
    %97 = arith.addf %93, %96 : vector<16x128xf32>
    %c0_97 = arith.constant 0 : index
    %c0_98 = arith.constant 0 : index
    %98 = vector.load %arg14[%c0_97, %c0_98] : memref<1x128xf32, #tpu.memory_space<vmem>>, vector<1x128xf32>
    %99 = vector.broadcast %98 : vector<1x128xf32> to vector<16x128xf32>
    %100 = arith.addf %97, %99 : vector<16x128xf32>
    %cst_99 = arith.constant 0.000000e+00 : f32
    %101 = vector.broadcast %cst_99 : f32 to vector<16x128xf32>
    %102 = arith.maximumf %100, %101 : vector<16x128xf32>
    %103 = arith.truncf %102 : vector<16x128xf32> to vector<16x128xbf16>
    %c20_100 = arith.constant 20 : index
    %c0_101 = arith.constant 0 : index
    %104 = vector.load %arg25[%c20_100, %c0_101] : memref<24x128xbf16, #tpu.memory_space<vmem>>, vector<4x128xbf16>
    %c4_102 = arith.constant 4 : index
    %c0_103 = arith.constant 0 : index
    %105 = vector.load %arg25[%c4_102, %c0_103] : memref<24x128xbf16, #tpu.memory_space<vmem>>, vector<4x128xbf16>
    tpu.vector_store %arg25[%c4_102, %c0_103], %104 {strides = array<i32>} : memref<24x128xbf16, #tpu.memory_space<vmem>>, vector<4x128xbf16>,
    %106 = arith.extui %0 : i1 to i32
    %c0_i32_104 = arith.constant 0 : i32
    %107 = arith.cmpi ne, %106, %c0_i32_104 : i32
    scf.if %107 {
      %cst_129 = arith.constant 0.000000e+00 : bf16
      %132 = vector.broadcast %cst_129 : bf16 to vector<4x128xbf16>
      %c4_130 = arith.constant 4 : index
      %c0_131 = arith.constant 0 : index
      %133 = vector.load %arg25[%c4_130, %c0_131] : memref<24x128xbf16, #tpu.memory_space<vmem>>, vector<4x128xbf16>
      tpu.vector_store %arg25[%c4_130, %c0_131], %132 {strides = array<i32>} : memref<24x128xbf16, #tpu.memory_space<vmem>>, vector<4x128xbf16>,
    } else {
    }
    %c8_105 = arith.constant 8 : index
    %c0_106 = arith.constant 0 : index
    %108 = vector.load %arg25[%c8_105, %c0_106] : memref<24x128xbf16, #tpu.memory_space<vmem>>, vector<16x128xbf16>
    tpu.vector_store %arg25[%c8_105, %c0_106], %103 {strides = array<i32>} : memref<24x128xbf16, #tpu.memory_space<vmem>>, vector<16x128xbf16>,
    %c4_107 = arith.constant 4 : index
    %c0_108 = arith.constant 0 : index
    %109 = vector.load %arg25[%c4_107, %c0_108] : memref<24x128xbf16, #tpu.memory_space<vmem>>, vector<16x128xbf16>
    %c0_109 = arith.constant 0 : index
    %c0_110 = arith.constant 0 : index
    %110 = vector.load %arg15[%c0_109, %c0_110] : memref<256x128xbf16, #tpu.memory_space<vmem>>, vector<128x128xbf16>
    %cst_111 = arith.constant dense<0.000000e+00> : vector<16x128xf32>
    %111 = tpu.matmul %109, %110, %cst_111 {dimension_numbers = #tpu.dot_dimension_numbers<[1], [0], [0], [1], [0, 0, 1, 1], [], []>} : vector<16x128xbf16>, vector<128x128xbf16>, vector<16x128xf32> -> vector<16x128xf32>
    %c8_112 = arith.constant 8 : index
    %c0_113 = arith.constant 0 : index
    %112 = vector.load %arg25[%c8_112, %c0_113] : memref<24x128xbf16, #tpu.memory_space<vmem>>, vector<16x128xbf16>
    %c128_114 = arith.constant 128 : index
    %c0_115 = arith.constant 0 : index
    %113 = vector.load %arg15[%c128_114, %c0_115] : memref<256x128xbf16, #tpu.memory_space<vmem>>, vector<128x128xbf16>
    %cst_116 = arith.constant dense<0.000000e+00> : vector<16x128xf32>
    %114 = tpu.matmul %112, %113, %cst_116 {dimension_numbers = #tpu.dot_dimension_numbers<[1], [0], [0], [1], [0, 0, 1, 1], [], []>} : vector<16x128xbf16>, vector<128x128xbf16>, vector<16x128xf32> -> vector<16x128xf32>
    %115 = arith.addf %111, %114 : vector<16x128xf32>
    %c0_117 = arith.constant 0 : index
    %c0_118 = arith.constant 0 : index
    %116 = vector.load %arg16[%c0_117, %c0_118] : memref<1x128xf32, #tpu.memory_space<vmem>>, vector<1x128xf32>
    %117 = vector.broadcast %116 : vector<1x128xf32> to vector<16x128xf32>
    %118 = arith.addf %115, %117 : vector<16x128xf32>
    %cst_119 = arith.constant 0.000000e+00 : f32
    %119 = vector.broadcast %cst_119 : f32 to vector<16x128xf32>
    %120 = arith.maximumf %118, %119 : vector<16x128xf32>
    %c0_120 = arith.constant 0 : index
    %c0_121 = arith.constant 0 : index
    %121 = vector.load %arg17[%c0_120, %c0_121] : memref<128x128xbf16, #tpu.memory_space<vmem>>, vector<128x128xbf16>
    %cst_122 = arith.constant dense<0.000000e+00> : vector<16x128xf32>
    %122 = tpu.matmul %85, %121, %cst_122 {dimension_numbers = #tpu.dot_dimension_numbers<[1], [0], [0], [1], [0, 0, 1, 1], [], []>} : vector<16x128xbf16>, vector<128x128xbf16>, vector<16x128xf32> -> vector<16x128xf32>
    %c0_123 = arith.constant 0 : index
    %c0_124 = arith.constant 0 : index
    %123 = vector.load %arg18[%c0_123, %c0_124] : memref<1x128xf32, #tpu.memory_space<vmem>>, vector<1x128xf32>
    %124 = vector.broadcast %123 : vector<1x128xf32> to vector<16x128xf32>
    %125 = arith.addf %122, %124 : vector<16x128xf32>
    %126 = arith.addf %120, %125 : vector<16x128xf32>
    %cst_125 = arith.constant 0.000000e+00 : f32
    %127 = vector.broadcast %cst_125 : f32 to vector<16x128xf32>
    %128 = arith.maximumf %126, %127 : vector<16x128xf32>
    %c0_126 = arith.constant 0 : index
    %c0_127 = arith.constant 0 : index
    %c0_128 = arith.constant 0 : index
    %129 = vector.load %arg19[%c0_126, %c0_127, %c0_128] : memref<1x16x128xf32, #tpu.memory_space<vmem>>, vector<1x16x128xf32>
    %130 = vector.shape_cast %129 : vector<1x16x128xf32> to vector<16x128xf32>
    %131 = vector.shape_cast %128 : vector<16x128xf32> to vector<1x16x128xf32>
    tpu.vector_store %arg19[%c0_126, %c0_127, %c0_128], %131 {strides = array<i32>} : memref<1x16x128xf32, #tpu.memory_space<vmem>>, vector<1x16x128xf32>,
    return
  }
  func.func @transform_0(%arg0: i32, %arg1: i32) -> (i32, i32, i32) {
    %c0_i32 = arith.constant 0 : i32
    %c0_i32_0 = arith.constant 0 : i32
    return %arg0, %arg1, %c0_i32 : i32, i32, i32
  }
  func.func @transform_1(%arg0: i32, %arg1: i32) -> (i32, i32) {
    %c0_i32 = arith.constant 0 : i32
    %c0_i32_0 = arith.constant 0 : i32
    %c0_i32_1 = arith.constant 0 : i32
    return %c0_i32, %c0_i32_0 : i32, i32
  }
  func.func @transform_2(%arg0: i32, %arg1: i32) -> (i32, i32) {
    %c0_i32 = arith.constant 0 : i32
    %c0_i32_0 = arith.constant 0 : i32
    %c0_i32_1 = arith.constant 0 : i32
    return %c0_i32, %c0_i32_0 : i32, i32
  }
  func.func @transform_3(%arg0: i32, %arg1: i32) -> (i32, i32) {
    %c0_i32 = arith.constant 0 : i32
    %c0_i32_0 = arith.constant 0 : i32
    %c0_i32_1 = arith.constant 0 : i32
    return %c0_i32, %c0_i32_0 : i32, i32
  }
  func.func @transform_4(%arg0: i32, %arg1: i32) -> (i32, i32) {
    %c0_i32 = arith.constant 0 : i32
    %c0_i32_0 = arith.constant 0 : i32
    %c0_i32_1 = arith.constant 0 : i32
    return %c0_i32, %c0_i32_0 : i32, i32
  }
  func.func @transform_5(%arg0: i32, %arg1: i32) -> (i32, i32) {
    %c0_i32 = arith.constant 0 : i32
    %c0_i32_0 = arith.constant 0 : i32
    %c0_i32_1 = arith.constant 0 : i32
    return %c0_i32, %c0_i32_0 : i32, i32
  }
  func.func @transform_6(%arg0: i32, %arg1: i32) -> (i32, i32) {
    %c0_i32 = arith.constant 0 : i32
    %c0_i32_0 = arith.constant 0 : i32
    %c0_i32_1 = arith.constant 0 : i32
    return %c0_i32, %c0_i32_0 : i32, i32
  }
  func.func @transform_7(%arg0: i32, %arg1: i32) -> (i32, i32) {
    %c0_i32 = arith.constant 0 : i32
    %c0_i32_0 = arith.constant 0 : i32
    %c0_i32_1 = arith.constant 0 : i32
    return %c0_i32, %c0_i32_0 : i32, i32
  }
  func.func @transform_8(%arg0: i32, %arg1: i32) -> (i32, i32) {
    %c0_i32 = arith.constant 0 : i32
    %c0_i32_0 = arith.constant 0 : i32
    %c0_i32_1 = arith.constant 0 : i32
    return %c0_i32, %c0_i32_0 : i32, i32
  }
  func.func @transform_9(%arg0: i32, %arg1: i32) -> (i32, i32) {
    %c0_i32 = arith.constant 0 : i32
    %c0_i32_0 = arith.constant 0 : i32
    %c0_i32_1 = arith.constant 0 : i32
    return %c0_i32, %c0_i32_0 : i32, i32
  }
  func.func @transform_10(%arg0: i32, %arg1: i32) -> (i32, i32) {
    %c0_i32 = arith.constant 0 : i32
    %c0_i32_0 = arith.constant 0 : i32
    %c0_i32_1 = arith.constant 0 : i32
    return %c0_i32, %c0_i32_0 : i32, i32
  }
  func.func @transform_11(%arg0: i32, %arg1: i32) -> (i32, i32) {
    %c0_i32 = arith.constant 0 : i32
    %c0_i32_0 = arith.constant 0 : i32
    %c0_i32_1 = arith.constant 0 : i32
    return %c0_i32, %c0_i32_0 : i32, i32
  }
  func.func @transform_12(%arg0: i32, %arg1: i32) -> (i32, i32) {
    %c0_i32 = arith.constant 0 : i32
    %c0_i32_0 = arith.constant 0 : i32
    %c0_i32_1 = arith.constant 0 : i32
    return %c0_i32, %c0_i32_0 : i32, i32
  }
  func.func @transform_13(%arg0: i32, %arg1: i32) -> (i32, i32) {
    %c0_i32 = arith.constant 0 : i32
    %c0_i32_0 = arith.constant 0 : i32
    %c0_i32_1 = arith.constant 0 : i32
    return %c0_i32, %c0_i32_0 : i32, i32
  }
  func.func @transform_14(%arg0: i32, %arg1: i32) -> (i32, i32) {
    %c0_i32 = arith.constant 0 : i32
    %c0_i32_0 = arith.constant 0 : i32
    %c0_i32_1 = arith.constant 0 : i32
    return %c0_i32, %c0_i32_0 : i32, i32
  }
  func.func @transform_15(%arg0: i32, %arg1: i32) -> (i32, i32) {
    %c0_i32 = arith.constant 0 : i32
    %c0_i32_0 = arith.constant 0 : i32
    %c0_i32_1 = arith.constant 0 : i32
    return %c0_i32, %c0_i32_0 : i32, i32
  }
  func.func @transform_16(%arg0: i32, %arg1: i32) -> (i32, i32) {
    %c0_i32 = arith.constant 0 : i32
    %c0_i32_0 = arith.constant 0 : i32
    %c0_i32_1 = arith.constant 0 : i32
    return %c0_i32, %c0_i32_0 : i32, i32
  }
  func.func @transform_17(%arg0: i32, %arg1: i32) -> (i32, i32, i32) {
    %c0_i32 = arith.constant 0 : i32
    %c0_i32_0 = arith.constant 0 : i32
    return %arg0, %arg1, %c0_i32 : i32, i32, i32
  }
}

</mosaic_0001>

<llo_original>
// kernel: tpu_custom_call.1
$region0: #{tpu_custom_call.1}
  #allocation0 [shape = 'u32[]', space=smem, size = 0x4, offset = 0x4, fixed_abs, tag = 'smem constant byte address 0x4 - core index']
  #allocation1 [shape = 'u32[72,128]{1,0:T(1,128)}', space=vmem, size = 0x9000, scoped, tag = 'internal scratch']
  #allocation2 [shape = 'bf16[24,128]{1,0:T(8,128)(2,1)}', space=vmem, size = 0x1800, scoped, tag = 'scratch operand']
  #allocation3 [shape = 'bf16[24,128]{1,0:T(8,128)(2,1)}', space=vmem, size = 0x1800, scoped, tag = 'scratch operand']
  #allocation4 [shape = 'bf16[24,128]{1,0:T(8,128)(2,1)}', space=vmem, size = 0x1800, scoped, tag = 'scratch operand']
  #allocation5 [shape = 'bf16[24,128]{1,0:T(8,128)(2,1)}', space=vmem, size = 0x1800, scoped, tag = 'scratch operand']
  #allocation6 [shape = 'bf16[24,128]{1,0:T(8,128)(2,1)}', space=vmem, size = 0x1800, scoped, tag = 'scratch operand']
  #allocation7 [shape = 'bf16[24,128]{1,0:T(8,128)(2,1)}', space=vmem, size = 0x1800, scoped, tag = 'scratch operand']
  %s0 = inlined_call_operand.hbm [shape: bf16[2,16,128], index: 0, kind: input, shape index: {}]
  %s1 = inlined_call_operand.hbm [shape: bf16[256,128], index: 1, kind: input, shape index: {}]
  %s2 = inlined_call_operand.vmem [shape: f32[1,128], index: 2, kind: input, shape index: {}]
  %s3 = inlined_call_operand.hbm [shape: bf16[256,128], index: 3, kind: input, shape index: {}]
  %s4 = inlined_call_operand.vmem [shape: f32[1,128], index: 4, kind: input, shape index: {}]
  %s5 = inlined_call_operand.hbm [shape: bf16[128,128], index: 5, kind: input, shape index: {}]
  %s6 = inlined_call_operand.vmem [shape: f32[1,128], index: 6, kind: input, shape index: {}]
  %s7 = inlined_call_operand.hbm [shape: bf16[256,128], index: 7, kind: input, shape index: {}]
  %s8 = inlined_call_operand.vmem [shape: f32[1,128], index: 8, kind: input, shape index: {}]
  %s9 = inlined_call_operand.hbm [shape: bf16[256,128], index: 9, kind: input, shape index: {}]
  %s10 = inlined_call_operand.vmem [shape: f32[1,128], index: 10, kind: input, shape index: {}]
  %s11 = inlined_call_operand.hbm [shape: bf16[256,128], index: 11, kind: input, shape index: {}]
  %s12 = inlined_call_operand.vmem [shape: f32[1,128], index: 12, kind: input, shape index: {}]
  %s13 = inlined_call_operand.hbm [shape: bf16[256,128], index: 13, kind: input, shape index: {}]
  %s14 = inlined_call_operand.vmem [shape: f32[1,128], index: 14, kind: input, shape index: {}]
  %s15 = inlined_call_operand.hbm [shape: bf16[128,128], index: 15, kind: input, shape index: {}]
  %s16 = inlined_call_operand.vmem [shape: f32[1,128], index: 16, kind: input, shape index: {}]
  %s17 = inlined_call_operand.hbm [shape: f32[2,16,128], index: 17, kind: output, shape index: {}]
  %s18 = sld [smem:[#allocation0]]
  $region161: #{tpu_custom_call.1} parent=0
    _
  %s20 = ssub.s32 1, %s18
  %s21 = scalar_select 0, %s20, %s18
  $region1: #{tpu_custom_call.1} parent=0
    #allocation8 [shape = 'u8[8192]{0}', space=vmem, size = 0x2000, scoped, tag = 'input window, operand 0']
    #allocation9 [shape = 's32[2]{0}', space=sflag, size = 0x8, scoped, tag = 'scoped memory for tpu_custom_call.1']
    #allocation10 [shape = 's32[2]{0}', space=sflag, size = 0x8, scoped, tag = 'scoped memory for tpu_custom_call.1']
    #allocation11 [shape = 'u8[65536]{0}', space=vmem, size = 0x10000, scoped, tag = 'input window, operand 1, single buffered']
    #allocation12 [shape = 's32[1]{0}', space=sflag, size = 0x4, scoped, tag = 'scoped memory for tpu_custom_call.1']
    #allocation13 [shape = 'u8[65536]{0}', space=vmem, size = 0x10000, scoped, tag = 'input window, operand 3, single buffered']
    #allocation14 [shape = 'u8[32768]{0}', space=vmem, size = 0x8000, scoped, tag = 'input window, operand 5, single buffered']
    #allocation15 [shape = 's32[1]{0}', space=sflag, size = 0x4, scoped, tag = 'scoped memory for tpu_custom_call.1']
    #allocation16 [shape = 'u8[65536]{0}', space=vmem, size = 0x10000, scoped, tag = 'input window, operand 7, single buffered']
    #allocation17 [shape = 'u8[65536]{0}', space=vmem, size = 0x10000, scoped, tag = 'input window, operand 9, single buffered']
    #allocation18 [shape = 's32[1]{0}', space=sflag, size = 0x4, scoped, tag = 'scoped memory for tpu_custom_call.1']
    #allocation19 [shape = 'u8[65536]{0}', space=vmem, size = 0x10000, scoped, tag = 'input window, operand 11, single buffered']
    #allocation20 [shape = 'u8[65536]{0}', space=vmem, size = 0x10000, scoped, tag = 'input window, operand 13, single buffered']
    #allocation21 [shape = 's32[1]{0}', space=sflag, size = 0x4, scoped, tag = 'scoped memory for tpu_custom_call.1']
    #allocation22 [shape = 'u8[32768]{0}', space=vmem, size = 0x8000, scoped, tag = 'input window, operand 15, single buffered']
    #allocation23 [shape = 'u8[16384]{0}', space=vmem, size = 0x4000, scoped, tag = 'output window, operand 0']
    %22 = vsyncpa [#allocation9], 0
    %s23 = scalar_lea.sflag [#allocation9], 1
    %24 = vsyncpa %s23, 0
    %25 = vsyncpa [#allocation12], 0
    %26 = vsyncpa [#allocation15], 0
    %27 = vsyncpa [#allocation18], 0
    %28 = vsyncpa [#allocation21], 0
    %29 = vsyncpa [#allocation10], 0
    %s30 = scalar_lea.sflag [#allocation10], 1
    %31 = vsyncpa %s30, 0
    loop: start=0, step=1, limit=4
    $region2: #{tpu_custom_call.1} parent=1 // loop_pre_header
      _
    $region3: #{tpu_custom_call.1} parent=1 // loop_header
      %s33 = sphi 0, %s37
      %p34 = scmp.ge.s32.totalorder %s33, 4
      %s40 = sphi 0, %s52
      %s41 = sphi 0, %s48
      %s42 = sphi 0, %s40
      %s43 = sphi 0, %s41
      %s44 = sphi 0, %s42
      %s45 = sphi 0, %s43
      %s57 = sphi 0, %s59
      %s60 = sphi 0, %s57
      %s61 = sphi 0, %s60
      %s77 = sphi 0, %s61
      %s81 = sphi 0, %s81
      %s83 = sphi 0, %s81
      %s84 = sphi 0, %s83
      %s98 = sphi 0, %s84
      %s102 = sphi 0, %s102
      %s104 = sphi 0, %s102
      %s105 = sphi 0, %s104
      %s119 = sphi 0, %s105
      %s123 = sphi 0, %s123
      %s125 = sphi 0, %s123
      %s126 = sphi 0, %s125
      %s140 = sphi 0, %s126
      %s144 = sphi 0, %s144
      %s146 = sphi 0, %s144
      %s147 = sphi 0, %s146
      %s161 = sphi 0, %s147
      %s165 = sphi 0, %s165
      %s167 = sphi 0, %s165
      %s168 = sphi 0, %s167
      %s182 = sphi 0, %s168
      %s186 = sphi 0, %s186
      %s188 = sphi 0, %s186
      %s189 = sphi 0, %s188
      %s203 = sphi 0, %s189
      %s207 = sphi 0, %s207
      %s209 = sphi 0, %s207
      %s210 = sphi 0, %s209
      %s224 = sphi 0, %s210
      %s228 = sphi 0, %s228
      %s230 = sphi 0, %s228
      %s231 = sphi 0, %s230
      %s245 = sphi 0, %s231
      %s249 = sphi 0, %s249
      %s251 = sphi 0, %s249
      %s252 = sphi 0, %s251
      %s266 = sphi 0, %s252
      %s270 = sphi 0, %s270
      %s272 = sphi 0, %s270
      %s273 = sphi 0, %s272
      %s287 = sphi 0, %s273
      %s291 = sphi 0, %s291
      %s293 = sphi 0, %s291
      %s294 = sphi 0, %s293
      %s308 = sphi 0, %s294
      %s312 = sphi 0, %s312
      %s314 = sphi 0, %s312
      %s315 = sphi 0, %s314
      %s329 = sphi 0, %s315
      %s333 = sphi 0, %s333
      %s335 = sphi 0, %s333
      %s336 = sphi 0, %s335
      %s350 = sphi 0, %s336
      %s354 = sphi 0, %s354
      %s356 = sphi 0, %s354
      %s357 = sphi 0, %s356
      %s371 = sphi 0, %s357
      %s375 = sphi 0, %s375
      %s377 = sphi 0, %s375
      %s378 = sphi 0, %s377
      %s392 = sphi 0, %s378
      %s396 = sphi 0, %s396
      %s398 = sphi 0, %s396
      %s399 = sphi 0, %s398
      %s413 = sphi 0, %s399
      %s421 = sphi 0, %s423
      %s424 = sphi 0, %s421
      %s425 = sphi 0, %s424
      %s441 = sphi 0, %s425
    $region4: #{tpu_custom_call.1} parent=1 // loop_header_branch
      %36 = sbr.rel (%p34) target = $region8
    $region5: #{tpu_custom_call.1} parent=1 // loop_body
      %s38 = ssub.s32 %s33, 1
      %s39 = ssub.s32 %s33, 2
      %s46 = sadd.s32 1, %s41
      %p47 = scmp.ge.s32.totalorder %s46, 1
      %s48 = scalar_select %p47, 0, %s46
      %s49 = sadd.s32 1, %s40
      %s50 = scalar_select %p47, %s49, %s40
      %p51 = scmp.ge.s32.totalorder %s50, 2
      %s52 = scalar_select %p51, 0, %s50
      %s53 = ssub.s32 %s40, %s52
      %s54 = ssub.s32 %s41, %s48
      %s55 = sor.u32 %s53, %s54
      %p56 = scmp.eq.s32.totalorder %s55, 0
      %s58 = sadd.s32 %s57, 1
      %s59 = scalar_select %p56, %s57, %s58
      %p62 = pneg %p56
      %p63 = scmp.eq.s32.totalorder %s33, 1
      %p64 = por %p62, %p63
      %p65 = scmp.ne.s32.totalorder %s57, %s60
      %p66 = scmp.eq.s32.totalorder %s33, 0
      %p67 = por %p65, %p66
      %p68 = scmp.ne.s32.totalorder %s57, %s60
      %p69 = scmp.eq.s32.totalorder %s38, 1
      %p70 = por %p68, %p69
      %p71 = scmp.ne.s32.totalorder %s60, %s61
      %p72 = scmp.eq.s32.totalorder %s38, 0
      %p73 = por %p71, %p72
      %p74 = scmp.ne.s32.totalorder %s60, %s61
      %p75 = scmp.eq.s32.totalorder %s39, 1
      %p76 = por %p74, %p75
      %p78 = scmp.ne.s32.totalorder %s61, %s77
      %p79 = scmp.eq.s32.totalorder %s39, 0
      %p80 = por %p78, %p79
      %s82 = sadd.s32 %s81, 1
      %p85 = scmp.eq.s32.totalorder %s33, 1
      %p86 = scmp.ne.s32.totalorder %s81, %s83
      %p87 = scmp.eq.s32.totalorder %s33, 0
      %p88 = por %p86, %p87
      %p89 = scmp.ne.s32.totalorder %s81, %s83
      %p90 = scmp.eq.s32.totalorder %s38, 1
      %p91 = por %p89, %p90
      %p92 = scmp.ne.s32.totalorder %s83, %s84
      %p93 = scmp.eq.s32.totalorder %s38, 0
      %p94 = por %p92, %p93
      %p95 = scmp.ne.s32.totalorder %s83, %s84
      %p96 = scmp.eq.s32.totalorder %s39, 1
      %p97 = por %p95, %p96
      %p99 = scmp.ne.s32.totalorder %s84, %s98
      %p100 = scmp.eq.s32.totalorder %s39, 0
      %p101 = por %p99, %p100
      %s103 = sadd.s32 %s102, 1
      %p106 = scmp.eq.s32.totalorder %s33, 1
      %p107 = scmp.ne.s32.totalorder %s102, %s104
      %p108 = scmp.eq.s32.totalorder %s33, 0
      %p109 = por %p107, %p108
      %p110 = scmp.ne.s32.totalorder %s102, %s104
      %p111 = scmp.eq.s32.totalorder %s38, 1
      %p112 = por %p110, %p111
      %p113 = scmp.ne.s32.totalorder %s104, %s105
      %p114 = scmp.eq.s32.totalorder %s38, 0
      %p115 = por %p113, %p114
      %p116 = scmp.ne.s32.totalorder %s104, %s105
      %p117 = scmp.eq.s32.totalorder %s39, 1
      %p118 = por %p116, %p117
      %p120 = scmp.ne.s32.totalorder %s105, %s119
      %p121 = scmp.eq.s32.totalorder %s39, 0
      %p122 = por %p120, %p121
      %s124 = sadd.s32 %s123, 1
      %p127 = scmp.eq.s32.totalorder %s33, 1
      %p128 = scmp.ne.s32.totalorder %s123, %s125
      %p129 = scmp.eq.s32.totalorder %s33, 0
      %p130 = por %p128, %p129
      %p131 = scmp.ne.s32.totalorder %s123, %s125
      %p132 = scmp.eq.s32.totalorder %s38, 1
      %p133 = por %p131, %p132
      %p134 = scmp.ne.s32.totalorder %s125, %s126
      %p135 = scmp.eq.s32.totalorder %s38, 0
      %p136 = por %p134, %p135
      %p137 = scmp.ne.s32.totalorder %s125, %s126
      %p138 = scmp.eq.s32.totalorder %s39, 1
      %p139 = por %p137, %p138
      %p141 = scmp.ne.s32.totalorder %s126, %s140
      %p142 = scmp.eq.s32.totalorder %s39, 0
      %p143 = por %p141, %p142
      %s145 = sadd.s32 %s144, 1
      %p148 = scmp.eq.s32.totalorder %s33, 1
      %p149 = scmp.ne.s32.totalorder %s144, %s146
      %p150 = scmp.eq.s32.totalorder %s33, 0
      %p151 = por %p149, %p150
      %p152 = scmp.ne.s32.totalorder %s144, %s146
      %p153 = scmp.eq.s32.totalorder %s38, 1
      %p154 = por %p152, %p153
      %p155 = scmp.ne.s32.totalorder %s146, %s147
      %p156 = scmp.eq.s32.totalorder %s38, 0
      %p157 = por %p155, %p156
      %p158 = scmp.ne.s32.totalorder %s146, %s147
      %p159 = scmp.eq.s32.totalorder %s39, 1
      %p160 = por %p158, %p159
      %p162 = scmp.ne.s32.totalorder %s147, %s161
      %p163 = scmp.eq.s32.totalorder %s39, 0
      %p164 = por %p162, %p163
      %s166 = sadd.s32 %s165, 1
      %p169 = scmp.eq.s32.totalorder %s33, 1
      %p170 = scmp.ne.s32.totalorder %s165, %s167
      %p171 = scmp.eq.s32.totalorder %s33, 0
      %p172 = por %p170, %p171
      %p173 = scmp.ne.s32.totalorder %s165, %s167
      %p174 = scmp.eq.s32.totalorder %s38, 1
      %p175 = por %p173, %p174
      %p176 = scmp.ne.s32.totalorder %s167, %s168
      %p177 = scmp.eq.s32.totalorder %s38, 0
      %p178 = por %p176, %p177
      %p179 = scmp.ne.s32.totalorder %s167, %s168
      %p180 = scmp.eq.s32.totalorder %s39, 1
      %p181 = por %p179, %p180
      %p183 = scmp.ne.s32.totalorder %s168, %s182
      %p184 = scmp.eq.s32.totalorder %s39, 0
      %p185 = por %p183, %p184
      %s187 = sadd.s32 %s186, 1
      %p190 = scmp.eq.s32.totalorder %s33, 1
      %p191 = scmp.ne.s32.totalorder %s186, %s188
      %p192 = scmp.eq.s32.totalorder %s33, 0
      %p193 = por %p191, %p192
      %p194 = scmp.ne.s32.totalorder %s186, %s188
      %p195 = scmp.eq.s32.totalorder %s38, 1
      %p196 = por %p194, %p195
      %p197 = scmp.ne.s32.totalorder %s188, %s189
      %p198 = scmp.eq.s32.totalorder %s38, 0
      %p199 = por %p197, %p198
      %p200 = scmp.ne.s32.totalorder %s188, %s189
      %p201 = scmp.eq.s32.totalorder %s39, 1
      %p202 = por %p200, %p201
      %p204 = scmp.ne.s32.totalorder %s189, %s203
      %p205 = scmp.eq.s32.totalorder %s39, 0
      %p206 = por %p204, %p205
      %s208 = sadd.s32 %s207, 1
      %p211 = scmp.eq.s32.totalorder %s33, 1
      %p212 = scmp.ne.s32.totalorder %s207, %s209
      %p213 = scmp.eq.s32.totalorder %s33, 0
      %p214 = por %p212, %p213
      %p215 = scmp.ne.s32.totalorder %s207, %s209
      %p216 = scmp.eq.s32.totalorder %s38, 1
      %p217 = por %p215, %p216
      %p218 = scmp.ne.s32.totalorder %s209, %s210
      %p219 = scmp.eq.s32.totalorder %s38, 0
      %p220 = por %p218, %p219
      %p221 = scmp.ne.s32.totalorder %s209, %s210
      %p222 = scmp.eq.s32.totalorder %s39, 1
      %p223 = por %p221, %p222
      %p225 = scmp.ne.s32.totalorder %s210, %s224
      %p226 = scmp.eq.s32.totalorder %s39, 0
      %p227 = por %p225, %p226
      %s229 = sadd.s32 %s228, 1
      %p232 = scmp.eq.s32.totalorder %s33, 1
      %p233 = scmp.ne.s32.totalorder %s228, %s230
      %p234 = scmp.eq.s32.totalorder %s33, 0
      %p235 = por %p233, %p234
      %p236 = scmp.ne.s32.totalorder %s228, %s230
      %p237 = scmp.eq.s32.totalorder %s38, 1
      %p238 = por %p236, %p237
      %p239 = scmp.ne.s32.totalorder %s230, %s231
      %p240 = scmp.eq.s32.totalorder %s38, 0
      %p241 = por %p239, %p240
      %p242 = scmp.ne.s32.totalorder %s230, %s231
      %p243 = scmp.eq.s32.totalorder %s39, 1
      %p244 = por %p242, %p243
      %p246 = scmp.ne.s32.totalorder %s231, %s245
      %p247 = scmp.eq.s32.totalorder %s39, 0
      %p248 = por %p246, %p247
      %s250 = sadd.s32 %s249, 1
      %p253 = scmp.eq.s32.totalorder %s33, 1
      %p254 = scmp.ne.s32.totalorder %s249, %s251
      %p255 = scmp.eq.s32.totalorder %s33, 0
      %p256 = por %p254, %p255
      %p257 = scmp.ne.s32.totalorder %s249, %s251
      %p258 = scmp.eq.s32.totalorder %s38, 1
      %p259 = por %p257, %p258
      %p260 = scmp.ne.s32.totalorder %s251, %s252
      %p261 = scmp.eq.s32.totalorder %s38, 0
      %p262 = por %p260, %p261
      %p263 = scmp.ne.s32.totalorder %s251, %s252
      %p264 = scmp.eq.s32.totalorder %s39, 1
      %p265 = por %p263, %p264
      %p267 = scmp.ne.s32.totalorder %s252, %s266
      %p268 = scmp.eq.s32.totalorder %s39, 0
      %p269 = por %p267, %p268
      %s271 = sadd.s32 %s270, 1
      %p274 = scmp.eq.s32.totalorder %s33, 1
      %p275 = scmp.ne.s32.totalorder %s270, %s272
      %p276 = scmp.eq.s32.totalorder %s33, 0
      %p277 = por %p275, %p276
      %p278 = scmp.ne.s32.totalorder %s270, %s272
      %p279 = scmp.eq.s32.totalorder %s38, 1
      %p280 = por %p278, %p279
      %p281 = scmp.ne.s32.totalorder %s272, %s273
      %p282 = scmp.eq.s32.totalorder %s38, 0
      %p283 = por %p281, %p282
      %p284 = scmp.ne.s32.totalorder %s272, %s273
      %p285 = scmp.eq.s32.totalorder %s39, 1
      %p286 = por %p284, %p285
      %p288 = scmp.ne.s32.totalorder %s273, %s287
      %p289 = scmp.eq.s32.totalorder %s39, 0
      %p290 = por %p288, %p289
      %s292 = sadd.s32 %s291, 1
      %p295 = scmp.eq.s32.totalorder %s33, 1
      %p296 = scmp.ne.s32.totalorder %s291, %s293
      %p297 = scmp.eq.s32.totalorder %s33, 0
      %p298 = por %p296, %p297
      %p299 = scmp.ne.s32.totalorder %s291, %s293
      %p300 = scmp.eq.s32.totalorder %s38, 1
      %p301 = por %p299, %p300
      %p302 = scmp.ne.s32.totalorder %s293, %s294
      %p303 = scmp.eq.s32.totalorder %s38, 0
      %p304 = por %p302, %p303
      %p305 = scmp.ne.s32.totalorder %s293, %s294
      %p306 = scmp.eq.s32.totalorder %s39, 1
      %p307 = por %p305, %p306
      %p309 = scmp.ne.s32.totalorder %s294, %s308
      %p310 = scmp.eq.s32.totalorder %s39, 0
      %p311 = por %p309, %p310
      %s313 = sadd.s32 %s312, 1
      %p316 = scmp.eq.s32.totalorder %s33, 1
      %p317 = scmp.ne.s32.totalorder %s312, %s314
      %p318 = scmp.eq.s32.totalorder %s33, 0
      %p319 = por %p317, %p318
      %p320 = scmp.ne.s32.totalorder %s312, %s314
      %p321 = scmp.eq.s32.totalorder %s38, 1
      %p322 = por %p320, %p321
      %p323 = scmp.ne.s32.totalorder %s314, %s315
      %p324 = scmp.eq.s32.totalorder %s38, 0
      %p325 = por %p323, %p324
      %p326 = scmp.ne.s32.totalorder %s314, %s315
      %p327 = scmp.eq.s32.totalorder %s39, 1
      %p328 = por %p326, %p327
      %p330 = scmp.ne.s32.totalorder %s315, %s329
      %p331 = scmp.eq.s32.totalorder %s39, 0
      %p332 = por %p330, %p331
      %s334 = sadd.s32 %s333, 1
      %p337 = scmp.eq.s32.totalorder %s33, 1
      %p338 = scmp.ne.s32.totalorder %s333, %s335
      %p339 = scmp.eq.s32.totalorder %s33, 0
      %p340 = por %p338, %p339
      %p341 = scmp.ne.s32.totalorder %s333, %s335
      %p342 = scmp.eq.s32.totalorder %s38, 1
      %p343 = por %p341, %p342
      %p344 = scmp.ne.s32.totalorder %s335, %s336
      %p345 = scmp.eq.s32.totalorder %s38, 0
      %p346 = por %p344, %p345
      %p347 = scmp.ne.s32.totalorder %s335, %s336
      %p348 = scmp.eq.s32.totalorder %s39, 1
      %p349 = por %p347, %p348
      %p351 = scmp.ne.s32.totalorder %s336, %s350
      %p352 = scmp.eq.s32.totalorder %s39, 0
      %p353 = por %p351, %p352
      %s355 = sadd.s32 %s354, 1
      %p358 = scmp.eq.s32.totalorder %s33, 1
      %p359 = scmp.ne.s32.totalorder %s354, %s356
      %p360 = scmp.eq.s32.totalorder %s33, 0
      %p361 = por %p359, %p360
      %p362 = scmp.ne.s32.totalorder %s354, %s356
      %p363 = scmp.eq.s32.totalorder %s38, 1
      %p364 = por %p362, %p363
      %p365 = scmp.ne.s32.totalorder %s356, %s357
      %p366 = scmp.eq.s32.totalorder %s38, 0
      %p367 = por %p365, %p366
      %p368 = scmp.ne.s32.totalorder %s356, %s357
      %p369 = scmp.eq.s32.totalorder %s39, 1
      %p370 = por %p368, %p369
      %p372 = scmp.ne.s32.totalorder %s357, %s371
      %p373 = scmp.eq.s32.totalorder %s39, 0
      %p374 = por %p372, %p373
      %s376 = sadd.s32 %s375, 1
      %p379 = scmp.eq.s32.totalorder %s33, 1
      %p380 = scmp.ne.s32.totalorder %s375, %s377
      %p381 = scmp.eq.s32.totalorder %s33, 0
      %p382 = por %p380, %p381
      %p383 = scmp.ne.s32.totalorder %s375, %s377
      %p384 = scmp.eq.s32.totalorder %s38, 1
      %p385 = por %p383, %p384
      %p386 = scmp.ne.s32.totalorder %s377, %s378
      %p387 = scmp.eq.s32.totalorder %s38, 0
      %p388 = por %p386, %p387
      %p389 = scmp.ne.s32.totalorder %s377, %s378
      %p390 = scmp.eq.s32.totalorder %s39, 1
      %p391 = por %p389, %p390
      %p393 = scmp.ne.s32.totalorder %s378, %s392
      %p394 = scmp.eq.s32.totalorder %s39, 0
      %p395 = por %p393, %p394
      %s397 = sadd.s32 %s396, 1
      %p400 = scmp.eq.s32.totalorder %s33, 1
      %p401 = scmp.ne.s32.totalorder %s396, %s398
      %p402 = scmp.eq.s32.totalorder %s33, 0
      %p403 = por %p401, %p402
      %p404 = scmp.ne.s32.totalorder %s396, %s398
      %p405 = scmp.eq.s32.totalorder %s38, 1
      %p406 = por %p404, %p405
      %p407 = scmp.ne.s32.totalorder %s398, %s399
      %p408 = scmp.eq.s32.totalorder %s38, 0
      %p409 = por %p407, %p408
      %p410 = scmp.ne.s32.totalorder %s398, %s399
      %p411 = scmp.eq.s32.totalorder %s39, 1
      %p412 = por %p410, %p411
      %p414 = scmp.ne.s32.totalorder %s399, %s413
      %p415 = scmp.eq.s32.totalorder %s39, 0
      %p416 = por %p414, %p415
      %s417 = ssub.s32 %s40, %s52
      %s418 = ssub.s32 %s41, %s48
      %s419 = sor.u32 %s417, %s418
      %p420 = scmp.eq.s32.totalorder %s419, 0
      %s422 = sadd.s32 %s421, 1
      %s423 = scalar_select %p420, %s421, %s422
      %p426 = pneg %p420
      %p427 = scmp.eq.s32.totalorder %s33, 1
      %p428 = por %p426, %p427
      %p429 = scmp.ne.s32.totalorder %s421, %s424
      %p430 = scmp.eq.s32.totalorder %s33, 0
      %p431 = por %p429, %p430
      %p432 = scmp.ne.s32.totalorder %s421, %s424
      %p433 = scmp.eq.s32.totalorder %s38, 1
      %p434 = por %p432, %p433
      %p435 = scmp.ne.s32.totalorder %s424, %s425
      %p436 = scmp.eq.s32.totalorder %s38, 0
      %p437 = por %p435, %p436
      %p438 = scmp.ne.s32.totalorder %s424, %s425
      %p439 = scmp.eq.s32.totalorder %s39, 1
      %p440 = por %p438, %p439
      %p442 = scmp.ne.s32.totalorder %s425, %s441
      %p443 = scmp.eq.s32.totalorder %s39, 0
      %p444 = por %p442, %p443
      %p445 = scmp.le.s32.totalorder 1, %s33
      %p446 = scmp.lt.s32.totalorder %s33, 3
      %p447 = pnand %p445, %p446
      %p448 = pneg %p447
      // Predicated region
      $region9: #{tpu_custom_call.1} parent=5 // pred_check
        _
      $region10: #{tpu_custom_call.1} parent=5 // pred_check_branch
        %450 = sbr.rel (%p447) target = $region12
      $region11: #{tpu_custom_call.1} parent=5 // pred_region
        %s451 = ssub.s32 %s33, 1
        // Predicated region
        $region13: #{tpu_custom_call.1} parent=11 // pred_check
          %p452 = pneg %p94
        $region14: #{tpu_custom_call.1} parent=11 // pred_check_branch
          %454 = sbr.rel (%p452) target = $region16
        $region15: #{tpu_custom_call.1} parent=11 // pred_region
          %456 = vsyncadd [#allocation12], 0
          %s457 = sshll.u32 %s1, 4
          %s458 = int_to_ptr.hbm [resolvable:$true] %s457
          %s459 = sshll.u32 [#allocation11], 4
          %s460 = int_to_ptr.vmem [resolvable:$true] %s459
          %465 = dma.hbm_to_vmem [thread:$0]  %s458, 2048, %s460, [#allocation12], 64, 64, 4
        $region16: #{tpu_custom_call.1} parent=11 // pred_fallthru
          _
        // Predicated region
        $region17: #{tpu_custom_call.1} parent=11 // pred_check
          %p466 = pneg %p115
        $region18: #{tpu_custom_call.1} parent=11 // pred_check_branch
          %468 = sbr.rel (%p466) target = $region20
        $region19: #{tpu_custom_call.1} parent=11 // pred_region
          _
        $region20: #{tpu_custom_call.1} parent=11 // pred_fallthru
          _
        // Predicated region
        $region21: #{tpu_custom_call.1} parent=11 // pred_check
          %p469 = pneg %p136
        $region22: #{tpu_custom_call.1} parent=11 // pred_check_branch
          %471 = sbr.rel (%p469) target = $region24
        $region23: #{tpu_custom_call.1} parent=11 // pred_region
          %473 = vsyncadd [#allocation12], 0
          %s474 = sshll.u32 %s3, 4
          %s475 = int_to_ptr.hbm [resolvable:$true] %s474
          %s476 = sshll.u32 [#allocation13], 4
          %s477 = int_to_ptr.vmem [resolvable:$true] %s476
          %482 = dma.hbm_to_vmem [thread:$0]  %s475, 2048, %s477, [#allocation12], 64, 64, 4
        $region24: #{tpu_custom_call.1} parent=11 // pred_fallthru
          _
        // Predicated region
        $region25: #{tpu_custom_call.1} parent=11 // pred_check
          %p483 = pneg %p157
        $region26: #{tpu_custom_call.1} parent=11 // pred_check_branch
          %485 = sbr.rel (%p483) target = $region28
        $region27: #{tpu_custom_call.1} parent=11 // pred_region
          _
        $region28: #{tpu_custom_call.1} parent=11 // pred_fallthru
          _
        // Predicated region
        $region29: #{tpu_custom_call.1} parent=11 // pred_check
          %p486 = pneg %p178
        $region30: #{tpu_custom_call.1} parent=11 // pred_check_branch
          %488 = sbr.rel (%p486) target = $region32
        $region31: #{tpu_custom_call.1} parent=11 // pred_region
          %490 = vsyncadd [#allocation15], 0
          %s491 = sshll.u32 %s5, 4
          %s492 = int_to_ptr.hbm [resolvable:$true] %s491
          %s493 = sshll.u32 [#allocation14], 4
          %s494 = int_to_ptr.vmem [resolvable:$true] %s493
          %499 = dma.hbm_to_vmem [thread:$0]  %s492, 1024, %s494, [#allocation15], 64, 64, 4
        $region32: #{tpu_custom_call.1} parent=11 // pred_fallthru
          _
        // Predicated region
        $region33: #{tpu_custom_call.1} parent=11 // pred_check
          %p500 = pneg %p199
        $region34: #{tpu_custom_call.1} parent=11 // pred_check_branch
          %502 = sbr.rel (%p500) target = $region36
        $region35: #{tpu_custom_call.1} parent=11 // pred_region
          _
        $region36: #{tpu_custom_call.1} parent=11 // pred_fallthru
          _
        // Predicated region
        $region37: #{tpu_custom_call.1} parent=11 // pred_check
          %p503 = pneg %p220
        $region38: #{tpu_custom_call.1} parent=11 // pred_check_branch
          %505 = sbr.rel (%p503) target = $region40
        $region39: #{tpu_custom_call.1} parent=11 // pred_region
          %507 = vsyncadd [#allocation15], 0
          %s508 = sshll.u32 %s7, 4
          %s509 = int_to_ptr.hbm [resolvable:$true] %s508
          %s510 = sshll.u32 [#allocation16], 4
          %s511 = int_to_ptr.vmem [resolvable:$true] %s510
          %516 = dma.hbm_to_vmem [thread:$0]  %s509, 2048, %s511, [#allocation15], 64, 64, 4
        $region40: #{tpu_custom_call.1} parent=11 // pred_fallthru
          _
        // Predicated region
        $region41: #{tpu_custom_call.1} parent=11 // pred_check
          %p517 = pneg %p241
        $region42: #{tpu_custom_call.1} parent=11 // pred_check_branch
          %519 = sbr.rel (%p517) target = $region44
        $region43: #{tpu_custom_call.1} parent=11 // pred_region
          _
        $region44: #{tpu_custom_call.1} parent=11 // pred_fallthru
          _
        // Predicated region
        $region45: #{tpu_custom_call.1} parent=11 // pred_check
          %p520 = pneg %p262
        $region46: #{tpu_custom_call.1} parent=11 // pred_check_branch
          %522 = sbr.rel (%p520) target = $region48
        $region47: #{tpu_custom_call.1} parent=11 // pred_region
          %524 = vsyncadd [#allocation18], 0
          %s525 = sshll.u32 %s9, 4
          %s526 = int_to_ptr.hbm [resolvable:$true] %s525
          %s527 = sshll.u32 [#allocation17], 4
          %s528 = int_to_ptr.vmem [resolvable:$true] %s527
          %533 = dma.hbm_to_vmem [thread:$0]  %s526, 2048, %s528, [#allocation18], 64, 64, 4
        $region48: #{tpu_custom_call.1} parent=11 // pred_fallthru
          _
        // Predicated region
        $region49: #{tpu_custom_call.1} parent=11 // pred_check
          %p534 = pneg %p283
        $region50: #{tpu_custom_call.1} parent=11 // pred_check_branch
          %536 = sbr.rel (%p534) target = $region52
        $region51: #{tpu_custom_call.1} parent=11 // pred_region
          _
        $region52: #{tpu_custom_call.1} parent=11 // pred_fallthru
          _
        // Predicated region
        $region53: #{tpu_custom_call.1} parent=11 // pred_check
          %p537 = pneg %p304
        $region54: #{tpu_custom_call.1} parent=11 // pred_check_branch
          %539 = sbr.rel (%p537) target = $region56
        $region55: #{tpu_custom_call.1} parent=11 // pred_region
          %541 = vsyncadd [#allocation18], 0
          %s542 = sshll.u32 %s11, 4
          %s543 = int_to_ptr.hbm [resolvable:$true] %s542
          %s544 = sshll.u32 [#allocation19], 4
          %s545 = int_to_ptr.vmem [resolvable:$true] %s544
          %550 = dma.hbm_to_vmem [thread:$0]  %s543, 2048, %s545, [#allocation18], 64, 64, 4
        $region56: #{tpu_custom_call.1} parent=11 // pred_fallthru
          _
        // Predicated region
        $region57: #{tpu_custom_call.1} parent=11 // pred_check
          %p551 = pneg %p325
        $region58: #{tpu_custom_call.1} parent=11 // pred_check_branch
          %553 = sbr.rel (%p551) target = $region60
        $region59: #{tpu_custom_call.1} parent=11 // pred_region
          _
        $region60: #{tpu_custom_call.1} parent=11 // pred_fallthru
          _
        // Predicated region
        $region61: #{tpu_custom_call.1} parent=11 // pred_check
          %p554 = pneg %p346
        $region62: #{tpu_custom_call.1} parent=11 // pred_check_branch
          %556 = sbr.rel (%p554) target = $region64
        $region63: #{tpu_custom_call.1} parent=11 // pred_region
          %558 = vsyncadd [#allocation21], 0
          %s559 = sshll.u32 %s13, 4
          %s560 = int_to_ptr.hbm [resolvable:$true] %s559
          %s561 = sshll.u32 [#allocation20], 4
          %s562 = int_to_ptr.vmem [resolvable:$true] %s561
          %567 = dma.hbm_to_vmem [thread:$0]  %s560, 2048, %s562, [#allocation21], 64, 64, 4
        $region64: #{tpu_custom_call.1} parent=11 // pred_fallthru
          _
        // Predicated region
        $region65: #{tpu_custom_call.1} parent=11 // pred_check
          %p568 = pneg %p367
        $region66: #{tpu_custom_call.1} parent=11 // pred_check_branch
          %570 = sbr.rel (%p568) target = $region68
        $region67: #{tpu_custom_call.1} parent=11 // pred_region
          _
        $region68: #{tpu_custom_call.1} parent=11 // pred_fallthru
          _
        // Predicated region
        $region69: #{tpu_custom_call.1} parent=11 // pred_check
          %p571 = pneg %p388
        $region70: #{tpu_custom_call.1} parent=11 // pred_check_branch
          %573 = sbr.rel (%p571) target = $region72
        $region71: #{tpu_custom_call.1} parent=11 // pred_region
          %575 = vsyncadd [#allocation21], 0
          %s576 = sshll.u32 %s15, 4
          %s577 = int_to_ptr.hbm [resolvable:$true] %s576
          %s578 = sshll.u32 [#allocation22], 4
          %s579 = int_to_ptr.vmem [resolvable:$true] %s578
          %584 = dma.hbm_to_vmem [thread:$0]  %s577, 1024, %s579, [#allocation21], 64, 64, 4
        $region72: #{tpu_custom_call.1} parent=11 // pred_fallthru
          _
        // Predicated region
        $region73: #{tpu_custom_call.1} parent=11 // pred_check
          %p585 = pneg %p409
        $region74: #{tpu_custom_call.1} parent=11 // pred_check_branch
          %587 = sbr.rel (%p585) target = $region76
        $region75: #{tpu_custom_call.1} parent=11 // pred_region
          _
        $region76: #{tpu_custom_call.1} parent=11 // pred_fallthru
          _
      $region12: #{tpu_custom_call.1} parent=5 // pred_fallthru
        _
      %p588 = scmp.lt.s32.totalorder %s33, 2
      // Predicated region
      $region77: #{tpu_custom_call.1} parent=5 // pred_check
        %p589 = pneg %p588
      $region78: #{tpu_custom_call.1} parent=5 // pred_check_branch
        %591 = sbr.rel (%p589) target = $region80
      $region79: #{tpu_custom_call.1} parent=5 // pred_region
        // Predicated region
        $region81: #{tpu_custom_call.1} parent=79 // pred_check
          %p592 = pneg %p67
        $region82: #{tpu_custom_call.1} parent=79 // pred_check_branch
          %594 = sbr.rel (%p592) target = $region84
        $region83: #{tpu_custom_call.1} parent=79 // pred_region
          %s595 = sand.u32 %s57, 1
          %s596 = scalar_lea.sflag [#allocation9], %s595
          %s597 = sand.u32 %s57, 1
          %s598 = smul.addr %s597, 8
          %s599 = scalar_lea.vmem [#allocation8], %s598
          %s600 = smul.u32 2, %s41
          %602 = vsyncadd %s596, 0
          %s603 = smul.addr %s40, 2
          %s604 = sadd.s32 %s600, %s603
          %s605 = smul.addr %s604, 4
          %s606 = scalar_lea.hbm %s0, %s605
          %s607 = sshll.u32 %s606, 4
          %s608 = int_to_ptr.hbm [resolvable:$true] %s607
          %s609 = sshll.u32 %s599, 4
          %s610 = int_to_ptr.vmem [resolvable:$true] %s609
          %615 = dma.hbm_to_vmem [thread:$0]  %s608, 128, %s610, %s596, 64, 64, 4
        $region84: #{tpu_custom_call.1} parent=79 // pred_fallthru
          _
      $region80: #{tpu_custom_call.1} parent=5 // pred_fallthru
        _
      %p616 = scmp.le.s32.totalorder 1, %s33
      %p617 = scmp.lt.s32.totalorder %s33, 3
      %p618 = pnand %p616, %p617
      %p619 = pneg %p618
      // Predicated region
      $region85: #{tpu_custom_call.1} parent=5 // pred_check
        _
      $region86: #{tpu_custom_call.1} parent=5 // pred_check_branch
        %621 = sbr.rel (%p618) target = $region88
      $region87: #{tpu_custom_call.1} parent=5 // pred_region
        %s622 = ssub.s32 %s33, 1
        %s623 = sand.u32 %s60, 1
        %s624 = scalar_lea.sflag [#allocation9], %s623
        %s625 = sand.u32 %s60, 1
        %s626 = smul.addr %s625, 8
        %s627 = scalar_lea.vmem [#allocation8], %s626
        // Predicated region
        $region89: #{tpu_custom_call.1} parent=87 // pred_check
          %p628 = pneg %p73
        $region90: #{tpu_custom_call.1} parent=87 // pred_check_branch
          %630 = sbr.rel (%p628) target = $region92
        $region91: #{tpu_custom_call.1} parent=87 // pred_region
          %632 = dma.done %s624, 128
        $region92: #{tpu_custom_call.1} parent=87 // pred_fallthru
          _
        // Predicated region
        $region93: #{tpu_custom_call.1} parent=87 // pred_check
          %p633 = pneg %p94
        $region94: #{tpu_custom_call.1} parent=87 // pred_check_branch
          %635 = sbr.rel (%p633) target = $region96
        $region95: #{tpu_custom_call.1} parent=87 // pred_region
          %637 = dma.done [#allocation12], 2048
        $region96: #{tpu_custom_call.1} parent=87 // pred_fallthru
          _
        // Predicated region
        $region97: #{tpu_custom_call.1} parent=87 // pred_check
          %p638 = pneg %p136
        $region98: #{tpu_custom_call.1} parent=87 // pred_check_branch
          %640 = sbr.rel (%p638) target = $region100
        $region99: #{tpu_custom_call.1} parent=87 // pred_region
          %642 = dma.done [#allocation12], 2048
        $region100: #{tpu_custom_call.1} parent=87 // pred_fallthru
          _
        // Predicated region
        $region101: #{tpu_custom_call.1} parent=87 // pred_check
          %p643 = pneg %p178
        $region102: #{tpu_custom_call.1} parent=87 // pred_check_branch
          %645 = sbr.rel (%p643) target = $region104
        $region103: #{tpu_custom_call.1} parent=87 // pred_region
          %647 = dma.done [#allocation15], 1024
        $region104: #{tpu_custom_call.1} parent=87 // pred_fallthru
          _
        // Predicated region
        $region105: #{tpu_custom_call.1} parent=87 // pred_check
          %p648 = pneg %p220
        $region106: #{tpu_custom_call.1} parent=87 // pred_check_branch
          %650 = sbr.rel (%p648) target = $region108
        $region107: #{tpu_custom_call.1} parent=87 // pred_region
          %652 = dma.done [#allocation15], 2048
        $region108: #{tpu_custom_call.1} parent=87 // pred_fallthru
          _
        // Predicated region
        $region109: #{tpu_custom_call.1} parent=87 // pred_check
          %p653 = pneg %p262
        $region110: #{tpu_custom_call.1} parent=87 // pred_check_branch
          %655 = sbr.rel (%p653) target = $region112
        $region111: #{tpu_custom_call.1} parent=87 // pred_region
          %657 = dma.done [#allocation18], 2048
        $region112: #{tpu_custom_call.1} parent=87 // pred_fallthru
          _
        // Predicated region
        $region113: #{tpu_custom_call.1} parent=87 // pred_check
          %p658 = pneg %p304
        $region114: #{tpu_custom_call.1} parent=87 // pred_check_branch
          %660 = sbr.rel (%p658) target = $region116
        $region115: #{tpu_custom_call.1} parent=87 // pred_region
          %662 = dma.done [#allocation18], 2048
        $region116: #{tpu_custom_call.1} parent=87 // pred_fallthru
          _
        // Predicated region
        $region117: #{tpu_custom_call.1} parent=87 // pred_check
          %p663 = pneg %p346
        $region118: #{tpu_custom_call.1} parent=87 // pred_check_branch
          %665 = sbr.rel (%p663) target = $region120
        $region119: #{tpu_custom_call.1} parent=87 // pred_region
          %667 = dma.done [#allocation21], 2048
        $region120: #{tpu_custom_call.1} parent=87 // pred_fallthru
          _
        // Predicated region
        $region121: #{tpu_custom_call.1} parent=87 // pred_check
          %p668 = pneg %p388
        $region122: #{tpu_custom_call.1} parent=87 // pred_check_branch
          %670 = sbr.rel (%p668) target = $region124
        $region123: #{tpu_custom_call.1} parent=87 // pred_region
          %672 = dma.done [#allocation21], 1024
        $region124: #{tpu_custom_call.1} parent=87 // pred_fallthru
          _
        %s673 = sand.u32 %s60, 1
        %s674 = scalar_lea.sflag [#allocation9], %s673
        %s675 = sand.u32 %s60, 1
        %s676 = smul.addr %s675, 8
        %s677 = scalar_lea.vmem [#allocation8], %s676
        %p678 = pneg %p73
        %p679 = pneg %p70
        %p680 = pneg %p94
        %p681 = pneg %p91
        %p682 = pneg %p115
        %p683 = pneg %p112
        %p684 = pneg %p136
        %p685 = pneg %p133
        %p686 = pneg %p157
        %p687 = pneg %p154
        %p688 = pneg %p178
        %p689 = pneg %p175
        %p690 = pneg %p199
        %p691 = pneg %p196
        %p692 = pneg %p220
        %p693 = pneg %p217
        %p694 = pneg %p241
        %p695 = pneg %p238
        %p696 = pneg %p262
        %p697 = pneg %p259
        %p698 = pneg %p283
        %p699 = pneg %p280
        %p700 = pneg %p304
        %p701 = pneg %p301
        %p702 = pneg %p325
        %p703 = pneg %p322
        %p704 = pneg %p346
        %p705 = pneg %p343
        %p706 = pneg %p367
        %p707 = pneg %p364
        %p708 = pneg %p388
        %p709 = pneg %p385
        %p710 = pneg %p409
        %p711 = pneg %p406
        %p712 = pneg %p437
        %p713 = pneg %p434
        %s714 = sand.u32 %s424, 1
        %s715 = scalar_lea.sflag [#allocation10], %s714
        %s716 = sand.u32 %s424, 1
        %s717 = smul.addr %s716, 16
        %s718 = scalar_lea.vmem [#allocation23], %s717
        %s719 = smul.u32 2, %s43
        %s720 = smul.u32 2, %s43
        %p722 = scmp.eq.s32.totalorder %s43, 0
        %v723 = vld [vmem:[%s627] sm:$0xf]
        %v724 = vld [vmem:[%s627 + $0x4] sm:$0xf]
        %v725 = vld [vmem:[#allocation2 + $0x8] sm:$0x8]
        %vm726 = vcmask 1043459
        %vm727 = vsmask.f32 7950
        %vm728 = vmand %vm726, %vm727
        %v729 = vld [vmem:[#allocation2] sm:$0x8]
        %v730 = vsel %vm728, %v725, %v729
        %731 = vst [vmem:[#allocation2] sm:$0x8] %v730
        // Predicated region
        $region125: #{tpu_custom_call.1} parent=87 // pred_check
          %p732 = pneg %p722
        $region126: #{tpu_custom_call.1} parent=87 // pred_check_branch
          %734 = sbr.rel (%p732) target = $region128
        $region127: #{tpu_custom_call.1} parent=87 // pred_region
          %v735 = vld [vmem:[#allocation2] sm:$0x8]
          %v736 = vsel %vm728, 0, %v735
          %737 = vst [vmem:[#allocation2] sm:$0x8] %v736
        $region128: #{tpu_custom_call.1} parent=87 // pred_fallthru
          _
        %738 = vst [vmem:[#allocation2 + $0x4] sm:$0xf] %v723
        %739 = vst [vmem:[#allocation2 + $0x8] sm:$0xf] %v724
        %v740 = vld [vmem:[#allocation2] sm:$0x8]
        %v741 = vld [vmem:[#allocation2 + $0x4] sm:$0xf]
        %v742 = vld [vmem:[#allocation2 + $0x8] sm:$0xf]
        %v743 = vld [vmem:[#allocation11] sm:$0xf]
        %v744 = vld [vmem:[#allocation11 + $0x4] sm:$0xf]
        %v745 = vld [vmem:[#allocation11 + $0x8] sm:$0xf]
        %v746 = vld [vmem:[#allocation11 + $0xc] sm:$0xf]
        %v747 = vld [vmem:[#allocation11 + $0x10] sm:$0xf]
        %v748 = vld [vmem:[#allocation11 + $0x14] sm:$0xf]
        %v749 = vld [vmem:[#allocation11 + $0x18] sm:$0xf]
        %v750 = vld [vmem:[#allocation11 + $0x1c] sm:$0xf]
        %v751 = vld [vmem:[#allocation11 + $0x20] sm:$0xf]
        %v752 = vld [vmem:[#allocation11 + $0x24] sm:$0xf]
        %v753 = vld [vmem:[#allocation11 + $0x28] sm:$0xf]
        %v754 = vld [vmem:[#allocation11 + $0x2c] sm:$0xf]
        %v755 = vld [vmem:[#allocation11 + $0x30] sm:$0xf]
        %v756 = vld [vmem:[#allocation11 + $0x34] sm:$0xf]
        %v757 = vld [vmem:[#allocation11 + $0x38] sm:$0xf]
        %v758 = vld [vmem:[#allocation11 + $0x3c] sm:$0xf]
        %v759 = vld [vmem:[#allocation11 + $0x40] sm:$0xf]
        %v760 = vld [vmem:[#allocation11 + $0x44] sm:$0xf]
        %v761 = vld [vmem:[#allocation11 + $0x48] sm:$0xf]
        %v762 = vld [vmem:[#allocation11 + $0x4c] sm:$0xf]
        %v763 = vld [vmem:[#allocation11 + $0x50] sm:$0xf]
        %v764 = vld [vmem:[#allocation11 + $0x54] sm:$0xf]
        %v765 = vld [vmem:[#allocation11 + $0x58] sm:$0xf]
        %v766 = vld [vmem:[#allocation11 + $0x5c] sm:$0xf]
        %v767 = vld [vmem:[#allocation11 + $0x60] sm:$0xf]
        %v768 = vld [vmem:[#allocation11 + $0x64] sm:$0xf]
        %v769 = vld [vmem:[#allocation11 + $0x68] sm:$0xf]
        %v770 = vld [vmem:[#allocation11 + $0x6c] sm:$0xf]
        %v771 = vld [vmem:[#allocation11 + $0x70] sm:$0xf]
        %v772 = vld [vmem:[#allocation11 + $0x74] sm:$0xf]
        %v773 = vld [vmem:[#allocation11 + $0x78] sm:$0xf]
        %v774 = vld [vmem:[#allocation11 + $0x7c] sm:$0xf]
        %v777 = vunpack.c.l.b16 %v741
        %v778 = vunpack.c.l.b16 %v742
        %v779 = vpack.c.b16 %v778, %v777
        %v797 = vunpack.c.l.b16 %v759
        %v798 = vunpack.c.l.b16 %v760
        %v799 = vunpack.c.l.b16 %v761
        %v800 = vunpack.c.l.b16 %v762
        %v801 = vunpack.c.l.b16 %v763
        %v802 = vunpack.c.l.b16 %v764
        %v803 = vunpack.c.l.b16 %v765
        %v804 = vunpack.c.l.b16 %v766
        %v805 = vunpack.c.l.b16 %v767
        %v806 = vunpack.c.l.b16 %v768
        %v807 = vunpack.c.l.b16 %v769
        %v808 = vunpack.c.l.b16 %v770
        %v809 = vunpack.c.l.b16 %v771
        %v810 = vunpack.c.l.b16 %v772
        %v811 = vunpack.c.l.b16 %v773
        %v812 = vunpack.c.l.b16 %v774
        %v813 = vpack.c.b16 %v798, %v797
        %v814 = vpack.c.b16 %v800, %v799
        %v815 = vpack.c.b16 %v802, %v801
        %v816 = vpack.c.b16 %v804, %v803
        %v817 = vpack.c.b16 %v806, %v805
        %v818 = vpack.c.b16 %v808, %v807
        %v819 = vpack.c.b16 %v810, %v809
        %v820 = vpack.c.b16 %v812, %v811
        %829 = vmatpush.bf16.msra.mxu0 %v820
        %830 = vmatpush.bf16.msra.mxu0 %v819
        %831 = vmatpush.bf16.msra.mxu0 %v818
        %832 = vmatpush.bf16.msra.mxu0 %v817
        %833 = vmatpush.bf16.msra.mxu0 %v816
        %834 = vmatpush.bf16.msra.mxu0 %v815
        %835 = vmatpush.bf16.msra.mxu0 %v814
        %836 = vmatpush.bf16.msra.mxu0 %v813
        %837 = vmatmul.bf16.gmra.mxu0 %v779
        %v838 = vpop.f32.mrf.mxu0
        %v839 = vadd.f32 0.0, %v838
        %v840 = vpop.f32.mrf.mxu0
        %v841 = vadd.f32 0.0, %v840
        %842 = vdwg.mxu0
        %v844 = vunpack.c.l.b16 %v740
        %v845 = vpack.c.b16 %v777, %v844
        %v846 = vpack.c.b16 %v778, %v778
        %vm847 = vsmask.f32 4352
        %v849 = vshrl.u32 %v845, 16
        %v851 = vrot.slane %v849, 3
        %v852 = vshll.u32 %v845, 16
        %v854 = vrot.slane %v852, 4
        %v855 = vor.u32 %v851, %v854
        %v857 = vshrl.u32 %v846, 16
        %v859 = vrot.slane %v857, 3
        %v860 = vshll.u32 %v846, 16
        %v862 = vrot.slane %v860, 4
        %v863 = vor.u32 %v859, %v862
        %v864 = vsel %vm847, %v855, %v863
        %v882 = vunpack.c.l.b16 %v743
        %v883 = vunpack.c.l.b16 %v744
        %v884 = vunpack.c.l.b16 %v745
        %v885 = vunpack.c.l.b16 %v746
        %v886 = vunpack.c.l.b16 %v747
        %v887 = vunpack.c.l.b16 %v748
        %v888 = vunpack.c.l.b16 %v749
        %v889 = vunpack.c.l.b16 %v750
        %v890 = vunpack.c.l.b16 %v751
        %v891 = vunpack.c.l.b16 %v752
        %v892 = vunpack.c.l.b16 %v753
        %v893 = vunpack.c.l.b16 %v754
        %v894 = vunpack.c.l.b16 %v755
        %v895 = vunpack.c.l.b16 %v756
        %v896 = vunpack.c.l.b16 %v757
        %v897 = vunpack.c.l.b16 %v758
        %v898 = vpack.c.b16 %v883, %v882
        %v899 = vpack.c.b16 %v885, %v884
        %v900 = vpack.c.b16 %v887, %v886
        %v901 = vpack.c.b16 %v889, %v888
        %v902 = vpack.c.b16 %v891, %v890
        %v903 = vpack.c.b16 %v893, %v892
        %v904 = vpack.c.b16 %v895, %v894
        %v905 = vpack.c.b16 %v897, %v896
        %914 = vmatpush.bf16.msra.mxu0 %v905
        %915 = vmatpush.bf16.msra.mxu0 %v904
        %916 = vmatpush.bf16.msra.mxu0 %v903
        %917 = vmatpush.bf16.msra.mxu0 %v902
        %918 = vmatpush.bf16.msra.mxu0 %v901
        %919 = vmatpush.bf16.msra.mxu0 %v900
        %920 = vmatpush.bf16.msra.mxu0 %v899
        %921 = vmatpush.bf16.msra.mxu0 %v898
        %922 = vmatmul.bf16.gmra.mxu0 %v864
        %v923 = vpop.f32.mrf.mxu0
        %v924 = vadd.f32 %v839, %v923
        %v925 = vpop.f32.mrf.mxu0
        %v926 = vadd.f32 %v841, %v925
        %927 = vdwg.mxu0
        %v928 = vld [vmem:[%s2] sm:$0x1]
        %v930 = vperm.slane %v928, 0
        %v932 = vadd.f32 %v924, %v930
        %v933 = vadd.f32 %v926, %v930
        %v934 = vmax.f32 %v932, 0.0
        %v935 = vmax.f32 %v933, 0.0
        %v936 = vpack.c.bf16 %v934, %v934
        %v937 = vpack.c.bf16 %v935, %v935
        %v938 = vld [vmem:[#allocation3 + $0x8] sm:$0x8]
        %v939 = vld [vmem:[#allocation3] sm:$0x8]
        %v940 = vsel %vm728, %v938, %v939
        %941 = vst [vmem:[#allocation3] sm:$0x8] %v940
        // Predicated region
        $region129: #{tpu_custom_call.1} parent=87 // pred_check
          %p942 = pneg %p722
        $region130: #{tpu_custom_call.1} parent=87 // pred_check_branch
          %944 = sbr.rel (%p942) target = $region132
        $region131: #{tpu_custom_call.1} parent=87 // pred_region
          %v945 = vld [vmem:[#allocation3] sm:$0x8]
          %v946 = vsel %vm728, 0, %v945
          %947 = vst [vmem:[#allocation3] sm:$0x8] %v946
        $region132: #{tpu_custom_call.1} parent=87 // pred_fallthru
          _
        %948 = vst [vmem:[#allocation3 + $0x4] sm:$0xf] %v936
        %949 = vst [vmem:[#allocation3 + $0x8] sm:$0xf] %v937
        %v950 = vld [vmem:[#allocation3] sm:$0x8]
        %v951 = vld [vmem:[#allocation3 + $0x4] sm:$0xf]
        %v952 = vld [vmem:[#allocation3 + $0x8] sm:$0xf]
        %v953 = vld [vmem:[#allocation13] sm:$0xf]
        %v954 = vld [vmem:[#allocation13 + $0x4] sm:$0xf]
        %v955 = vld [vmem:[#allocation13 + $0x8] sm:$0xf]
        %v956 = vld [vmem:[#allocation13 + $0xc] sm:$0xf]
        %v957 = vld [vmem:[#allocation13 + $0x10] sm:$0xf]
        %v958 = vld [vmem:[#allocation13 + $0x14] sm:$0xf]
        %v959 = vld [vmem:[#allocation13 + $0x18] sm:$0xf]
        %v960 = vld [vmem:[#allocation13 + $0x1c] sm:$0xf]
        %v961 = vld [vmem:[#allocation13 + $0x20] sm:$0xf]
        %v962 = vld [vmem:[#allocation13 + $0x24] sm:$0xf]
        %v963 = vld [vmem:[#allocation13 + $0x28] sm:$0xf]
        %v964 = vld [vmem:[#allocation13 + $0x2c] sm:$0xf]
        %v965 = vld [vmem:[#allocation13 + $0x30] sm:$0xf]
        %v966 = vld [vmem:[#allocation13 + $0x34] sm:$0xf]
        %v967 = vld [vmem:[#allocation13 + $0x38] sm:$0xf]
        %v968 = vld [vmem:[#allocation13 + $0x3c] sm:$0xf]
        %v969 = vld [vmem:[#allocation13 + $0x40] sm:$0xf]
        %v970 = vld [vmem:[#allocation13 + $0x44] sm:$0xf]
        %v971 = vld [vmem:[#allocation13 + $0x48] sm:$0xf]
        %v972 = vld [vmem:[#allocation13 + $0x4c] sm:$0xf]
        %v973 = vld [vmem:[#allocation13 + $0x50] sm:$0xf]
        %v974 = vld [vmem:[#allocation13 + $0x54] sm:$0xf]
        %v975 = vld [vmem:[#allocation13 + $0x58] sm:$0xf]
        %v976 = vld [vmem:[#allocation13 + $0x5c] sm:$0xf]
        %v977 = vld [vmem:[#allocation13 + $0x60] sm:$0xf]
        %v978 = vld [vmem:[#allocation13 + $0x64] sm:$0xf]
        %v979 = vld [vmem:[#allocation13 + $0x68] sm:$0xf]
        %v980 = vld [vmem:[#allocation13 + $0x6c] sm:$0xf]
        %v981 = vld [vmem:[#allocation13 + $0x70] sm:$0xf]
        %v982 = vld [vmem:[#allocation13 + $0x74] sm:$0xf]
        %v983 = vld [vmem:[#allocation13 + $0x78] sm:$0xf]
        %v984 = vld [vmem:[#allocation13 + $0x7c] sm:$0xf]
        %v987 = vunpack.c.l.b16 %v951
        %v988 = vunpack.c.l.b16 %v952
        %v989 = vpack.c.b16 %v988, %v987
        %v1007 = vunpack.c.l.b16 %v969
        %v1008 = vunpack.c.l.b16 %v970
        %v1009 = vunpack.c.l.b16 %v971
        %v1010 = vunpack.c.l.b16 %v972
        %v1011 = vunpack.c.l.b16 %v973
        %v1012 = vunpack.c.l.b16 %v974
        %v1013 = vunpack.c.l.b16 %v975
        %v1014 = vunpack.c.l.b16 %v976
        %v1015 = vunpack.c.l.b16 %v977
        %v1016 = vunpack.c.l.b16 %v978
        %v1017 = vunpack.c.l.b16 %v979
        %v1018 = vunpack.c.l.b16 %v980
        %v1019 = vunpack.c.l.b16 %v981
        %v1020 = vunpack.c.l.b16 %v982
        %v1021 = vunpack.c.l.b16 %v983
        %v1022 = vunpack.c.l.b16 %v984
        %v1023 = vpack.c.b16 %v1008, %v1007
        %v1024 = vpack.c.b16 %v1010, %v1009
        %v1025 = vpack.c.b16 %v1012, %v1011
        %v1026 = vpack.c.b16 %v1014, %v1013
        %v1027 = vpack.c.b16 %v1016, %v1015
        %v1028 = vpack.c.b16 %v1018, %v1017
        %v1029 = vpack.c.b16 %v1020, %v1019
        %v1030 = vpack.c.b16 %v1022, %v1021
        %1039 = vmatpush.bf16.msra.mxu0 %v1030
        %1040 = vmatpush.bf16.msra.mxu0 %v1029
        %1041 = vmatpush.bf16.msra.mxu0 %v1028
        %1042 = vmatpush.bf16.msra.mxu0 %v1027
        %1043 = vmatpush.bf16.msra.mxu0 %v1026
        %1044 = vmatpush.bf16.msra.mxu0 %v1025
        %1045 = vmatpush.bf16.msra.mxu0 %v1024
        %1046 = vmatpush.bf16.msra.mxu0 %v1023
        %1047 = vmatmul.bf16.gmra.mxu0 %v989
        %v1048 = vpop.f32.mrf.mxu0
        %v1049 = vadd.f32 0.0, %v1048
        %v1050 = vpop.f32.mrf.mxu0
        %v1051 = vadd.f32 0.0, %v1050
        %1052 = vdwg.mxu0
        %v1054 = vunpack.c.l.b16 %v950
        %v1055 = vpack.c.b16 %v987, %v1054
        %v1056 = vpack.c.b16 %v988, %v988
        %v1058 = vshrl.u32 %v1055, 16
        %v1060 = vrot.slane %v1058, 3
        %v1061 = vshll.u32 %v1055, 16
        %v1063 = vrot.slane %v1061, 4
        %v1064 = vor.u32 %v1060, %v1063
        %v1066 = vshrl.u32 %v1056, 16
        %v1068 = vrot.slane %v1066, 3
        %v1069 = vshll.u32 %v1056, 16
        %v1071 = vrot.slane %v1069, 4
        %v1072 = vor.u32 %v1068, %v1071
        %v1073 = vsel %vm847, %v1064, %v1072
        %v1091 = vunpack.c.l.b16 %v953
        %v1092 = vunpack.c.l.b16 %v954
        %v1093 = vunpack.c.l.b16 %v955
        %v1094 = vunpack.c.l.b16 %v956
        %v1095 = vunpack.c.l.b16 %v957
        %v1096 = vunpack.c.l.b16 %v958
        %v1097 = vunpack.c.l.b16 %v959
        %v1098 = vunpack.c.l.b16 %v960
        %v1099 = vunpack.c.l.b16 %v961
        %v1100 = vunpack.c.l.b16 %v962
        %v1101 = vunpack.c.l.b16 %v963
        %v1102 = vunpack.c.l.b16 %v964
        %v1103 = vunpack.c.l.b16 %v965
        %v1104 = vunpack.c.l.b16 %v966
        %v1105 = vunpack.c.l.b16 %v967
        %v1106 = vunpack.c.l.b16 %v968
        %v1107 = vpack.c.b16 %v1092, %v1091
        %v1108 = vpack.c.b16 %v1094, %v1093
        %v1109 = vpack.c.b16 %v1096, %v1095
        %v1110 = vpack.c.b16 %v1098, %v1097
        %v1111 = vpack.c.b16 %v1100, %v1099
        %v1112 = vpack.c.b16 %v1102, %v1101
        %v1113 = vpack.c.b16 %v1104, %v1103
        %v1114 = vpack.c.b16 %v1106, %v1105
        %1123 = vmatpush.bf16.msra.mxu0 %v1114
        %1124 = vmatpush.bf16.msra.mxu0 %v1113
        %1125 = vmatpush.bf16.msra.mxu0 %v1112
        %1126 = vmatpush.bf16.msra.mxu0 %v1111
        %1127 = vmatpush.bf16.msra.mxu0 %v1110
        %1128 = vmatpush.bf16.msra.mxu0 %v1109
        %1129 = vmatpush.bf16.msra.mxu0 %v1108
        %1130 = vmatpush.bf16.msra.mxu0 %v1107
        %1131 = vmatmul.bf16.gmra.mxu0 %v1073
        %v1132 = vpop.f32.mrf.mxu0
        %v1133 = vadd.f32 %v1049, %v1132
        %v1134 = vpop.f32.mrf.mxu0
        %v1135 = vadd.f32 %v1051, %v1134
        %1136 = vdwg.mxu0
        %v1137 = vld [vmem:[%s4] sm:$0x1]
        %v1139 = vperm.slane %v1137, 0
        %v1141 = vadd.f32 %v1133, %v1139
        %v1142 = vadd.f32 %v1135, %v1139
        %v1143 = vmax.f32 %v1141, 0.0
        %v1144 = vmax.f32 %v1142, 0.0
        %v1145 = vld [vmem:[#allocation14] sm:$0xf]
        %v1146 = vld [vmem:[#allocation14 + $0x4] sm:$0xf]
        %v1147 = vld [vmem:[#allocation14 + $0x8] sm:$0xf]
        %v1148 = vld [vmem:[#allocation14 + $0xc] sm:$0xf]
        %v1149 = vld [vmem:[#allocation14 + $0x10] sm:$0xf]
        %v1150 = vld [vmem:[#allocation14 + $0x14] sm:$0xf]
        %v1151 = vld [vmem:[#allocation14 + $0x18] sm:$0xf]
        %v1152 = vld [vmem:[#allocation14 + $0x1c] sm:$0xf]
        %v1153 = vld [vmem:[#allocation14 + $0x20] sm:$0xf]
        %v1154 = vld [vmem:[#allocation14 + $0x24] sm:$0xf]
        %v1155 = vld [vmem:[#allocation14 + $0x28] sm:$0xf]
        %v1156 = vld [vmem:[#allocation14 + $0x2c] sm:$0xf]
        %v1157 = vld [vmem:[#allocation14 + $0x30] sm:$0xf]
        %v1158 = vld [vmem:[#allocation14 + $0x34] sm:$0xf]
        %v1159 = vld [vmem:[#allocation14 + $0x38] sm:$0xf]
        %v1160 = vld [vmem:[#allocation14 + $0x3c] sm:$0xf]
        %v1161 = vld [vmem:[%s6] sm:$0x1]
        %v1163 = vperm.slane %v1161, 0
        %v1167 = vunpack.c.l.b16 %v723
        %v1168 = vunpack.c.l.b16 %v724
        %v1169 = vpack.c.b16 %v1168, %v1167
        %v1187 = vunpack.c.l.b16 %v1145
        %v1188 = vunpack.c.l.b16 %v1146
        %v1189 = vunpack.c.l.b16 %v1147
        %v1190 = vunpack.c.l.b16 %v1148
        %v1191 = vunpack.c.l.b16 %v1149
        %v1192 = vunpack.c.l.b16 %v1150
        %v1193 = vunpack.c.l.b16 %v1151
        %v1194 = vunpack.c.l.b16 %v1152
        %v1195 = vunpack.c.l.b16 %v1153
        %v1196 = vunpack.c.l.b16 %v1154
        %v1197 = vunpack.c.l.b16 %v1155
        %v1198 = vunpack.c.l.b16 %v1156
        %v1199 = vunpack.c.l.b16 %v1157
        %v1200 = vunpack.c.l.b16 %v1158
        %v1201 = vunpack.c.l.b16 %v1159
        %v1202 = vunpack.c.l.b16 %v1160
        %v1203 = vpack.c.b16 %v1188, %v1187
        %v1204 = vpack.c.b16 %v1190, %v1189
        %v1205 = vpack.c.b16 %v1192, %v1191
        %v1206 = vpack.c.b16 %v1194, %v1193
        %v1207 = vpack.c.b16 %v1196, %v1195
        %v1208 = vpack.c.b16 %v1198, %v1197
        %v1209 = vpack.c.b16 %v1200, %v1199
        %v1210 = vpack.c.b16 %v1202, %v1201
        %1219 = vmatpush.bf16.msra.mxu0 %v1210
        %1220 = vmatpush.bf16.msra.mxu0 %v1209
        %1221 = vmatpush.bf16.msra.mxu0 %v1208
        %1222 = vmatpush.bf16.msra.mxu0 %v1207
        %1223 = vmatpush.bf16.msra.mxu0 %v1206
        %1224 = vmatpush.bf16.msra.mxu0 %v1205
        %1225 = vmatpush.bf16.msra.mxu0 %v1204
        %1226 = vmatpush.bf16.msra.mxu0 %v1203
        %1227 = vmatmul.bf16.gmra.mxu0 %v1169
        %v1228 = vpop.f32.mrf.mxu0
        %v1229 = vadd.f32 %v1163, %v1228
        %v1230 = vpop.f32.mrf.mxu0
        %v1231 = vadd.f32 %v1163, %v1230
        %1232 = vdwg.mxu0
        %v1233 = vadd.f32 %v1143, %v1229
        %v1234 = vadd.f32 %v1144, %v1231
        %v1235 = vmax.f32 %v1233, 0.0
        %v1236 = vmax.f32 %v1234, 0.0
        %v1237 = vpack.c.bf16 %v1235, %v1235
        %v1238 = vpack.c.bf16 %v1236, %v1236
        %v1239 = vld [vmem:[#allocation4 + $0x8] sm:$0x8]
        %1240 = vst [vmem:[#allocation4] sm:$0x8] %v1239
        // Predicated region
        $region133: #{tpu_custom_call.1} parent=87 // pred_check
          %p1241 = pneg %p722
        $region134: #{tpu_custom_call.1} parent=87 // pred_check_branch
          %1243 = sbr.rel (%p1241) target = $region136
        $region135: #{tpu_custom_call.1} parent=87 // pred_region
          %1244 = vst [vmem:[#allocation4] sm:$0x8] 0
        $region136: #{tpu_custom_call.1} parent=87 // pred_fallthru
          _
        %1245 = vst [vmem:[#allocation4 + $0x4] sm:$0xf] %v1237
        %1246 = vst [vmem:[#allocation4 + $0x8] sm:$0xf] %v1238
        %v1247 = vld [vmem:[#allocation4] sm:$0x8]
        %v1248 = vld [vmem:[#allocation4 + $0x4] sm:$0xf]
        %v1249 = vld [vmem:[#allocation4 + $0x8] sm:$0x7]
        %v1250 = vld [vmem:[#allocation16] sm:$0xf]
        %v1251 = vld [vmem:[#allocation16 + $0x4] sm:$0xf]
        %v1252 = vld [vmem:[#allocation16 + $0x8] sm:$0xf]
        %v1253 = vld [vmem:[#allocation16 + $0xc] sm:$0xf]
        %v1254 = vld [vmem:[#allocation16 + $0x10] sm:$0xf]
        %v1255 = vld [vmem:[#allocation16 + $0x14] sm:$0xf]
        %v1256 = vld [vmem:[#allocation16 + $0x18] sm:$0xf]
        %v1257 = vld [vmem:[#allocation16 + $0x1c] sm:$0xf]
        %v1258 = vld [vmem:[#allocation16 + $0x20] sm:$0xf]
        %v1259 = vld [vmem:[#allocation16 + $0x24] sm:$0xf]
        %v1260 = vld [vmem:[#allocation16 + $0x28] sm:$0xf]
        %v1261 = vld [vmem:[#allocation16 + $0x2c] sm:$0xf]
        %v1262 = vld [vmem:[#allocation16 + $0x30] sm:$0xf]
        %v1263 = vld [vmem:[#allocation16 + $0x34] sm:$0xf]
        %v1264 = vld [vmem:[#allocation16 + $0x38] sm:$0xf]
        %v1265 = vld [vmem:[#allocation16 + $0x3c] sm:$0xf]
        %v1266 = vld [vmem:[#allocation4 + $0x8] sm:$0xf]
        %v1267 = vld [vmem:[#allocation16 + $0x40] sm:$0xf]
        %v1268 = vld [vmem:[#allocation16 + $0x44] sm:$0xf]
        %v1269 = vld [vmem:[#allocation16 + $0x48] sm:$0xf]
        %v1270 = vld [vmem:[#allocation16 + $0x4c] sm:$0xf]
        %v1271 = vld [vmem:[#allocation16 + $0x50] sm:$0xf]
        %v1272 = vld [vmem:[#allocation16 + $0x54] sm:$0xf]
        %v1273 = vld [vmem:[#allocation16 + $0x58] sm:$0xf]
        %v1274 = vld [vmem:[#allocation16 + $0x5c] sm:$0xf]
        %v1275 = vld [vmem:[#allocation16 + $0x60] sm:$0xf]
        %v1276 = vld [vmem:[#allocation16 + $0x64] sm:$0xf]
        %v1277 = vld [vmem:[#allocation16 + $0x68] sm:$0xf]
        %v1278 = vld [vmem:[#allocation16 + $0x6c] sm:$0xf]
        %v1279 = vld [vmem:[#allocation16 + $0x70] sm:$0xf]
        %v1280 = vld [vmem:[#allocation16 + $0x74] sm:$0xf]
        %v1281 = vld [vmem:[#allocation16 + $0x78] sm:$0xf]
        %v1282 = vld [vmem:[#allocation16 + $0x7c] sm:$0xf]
        %v1285 = vunpack.c.l.b16 %v1248
        %v1286 = vunpack.c.l.b16 %v1266
        %v1287 = vpack.c.b16 %v1286, %v1285
        %v1305 = vunpack.c.l.b16 %v1267
        %v1306 = vunpack.c.l.b16 %v1268
        %v1307 = vunpack.c.l.b16 %v1269
        %v1308 = vunpack.c.l.b16 %v1270
        %v1309 = vunpack.c.l.b16 %v1271
        %v1310 = vunpack.c.l.b16 %v1272
        %v1311 = vunpack.c.l.b16 %v1273
        %v1312 = vunpack.c.l.b16 %v1274
        %v1313 = vunpack.c.l.b16 %v1275
        %v1314 = vunpack.c.l.b16 %v1276
        %v1315 = vunpack.c.l.b16 %v1277
        %v1316 = vunpack.c.l.b16 %v1278
        %v1317 = vunpack.c.l.b16 %v1279
        %v1318 = vunpack.c.l.b16 %v1280
        %v1319 = vunpack.c.l.b16 %v1281
        %v1320 = vunpack.c.l.b16 %v1282
        %v1321 = vpack.c.b16 %v1306, %v1305
        %v1322 = vpack.c.b16 %v1308, %v1307
        %v1323 = vpack.c.b16 %v1310, %v1309
        %v1324 = vpack.c.b16 %v1312, %v1311
        %v1325 = vpack.c.b16 %v1314, %v1313
        %v1326 = vpack.c.b16 %v1316, %v1315
        %v1327 = vpack.c.b16 %v1318, %v1317
        %v1328 = vpack.c.b16 %v1320, %v1319
        %1337 = vmatpush.bf16.msra.mxu0 %v1328
        %1338 = vmatpush.bf16.msra.mxu0 %v1327
        %1339 = vmatpush.bf16.msra.mxu0 %v1326
        %1340 = vmatpush.bf16.msra.mxu0 %v1325
        %1341 = vmatpush.bf16.msra.mxu0 %v1324
        %1342 = vmatpush.bf16.msra.mxu0 %v1323
        %1343 = vmatpush.bf16.msra.mxu0 %v1322
        %1344 = vmatpush.bf16.msra.mxu0 %v1321
        %1345 = vmatmul.bf16.gmra.mxu0 %v1287
        %v1346 = vpop.f32.mrf.mxu0
        %v1347 = vadd.f32 0.0, %v1346
        %v1348 = vpop.f32.mrf.mxu0
        %v1349 = vadd.f32 0.0, %v1348
        %1350 = vdwg.mxu0
        %v1353 = vunpack.c.l.b16 %v1247
        %v1354 = vunpack.c.l.b16 %v1249
        %v1355 = vpack.c.b16 %v1285, %v1353
        %v1356 = vpack.c.b16 %v1354, %v1354
        %vm1357 = vcmask 1044480
        %v1358 = vrot.slane %v1355, 3
        %v1359 = vrot.slane %v1356, 3
        %v1360 = vsel %vm1357, %v1358, %v1359
        %v1378 = vunpack.c.l.b16 %v1250
        %v1379 = vunpack.c.l.b16 %v1251
        %v1380 = vunpack.c.l.b16 %v1252
        %v1381 = vunpack.c.l.b16 %v1253
        %v1382 = vunpack.c.l.b16 %v1254
        %v1383 = vunpack.c.l.b16 %v1255
        %v1384 = vunpack.c.l.b16 %v1256
        %v1385 = vunpack.c.l.b16 %v1257
        %v1386 = vunpack.c.l.b16 %v1258
        %v1387 = vunpack.c.l.b16 %v1259
        %v1388 = vunpack.c.l.b16 %v1260
        %v1389 = vunpack.c.l.b16 %v1261
        %v1390 = vunpack.c.l.b16 %v1262
        %v1391 = vunpack.c.l.b16 %v1263
        %v1392 = vunpack.c.l.b16 %v1264
        %v1393 = vunpack.c.l.b16 %v1265
        %v1394 = vpack.c.b16 %v1379, %v1378
        %v1395 = vpack.c.b16 %v1381, %v1380
        %v1396 = vpack.c.b16 %v1383, %v1382
        %v1397 = vpack.c.b16 %v1385, %v1384
        %v1398 = vpack.c.b16 %v1387, %v1386
        %v1399 = vpack.c.b16 %v1389, %v1388
        %v1400 = vpack.c.b16 %v1391, %v1390
        %v1401 = vpack.c.b16 %v1393, %v1392
        %1410 = vmatpush.bf16.msra.mxu0 %v1401
        %1411 = vmatpush.bf16.msra.mxu0 %v1400
        %1412 = vmatpush.bf16.msra.mxu0 %v1399
        %1413 = vmatpush.bf16.msra.mxu0 %v1398
        %1414 = vmatpush.bf16.msra.mxu0 %v1397
        %1415 = vmatpush.bf16.msra.mxu0 %v1396
        %1416 = vmatpush.bf16.msra.mxu0 %v1395
        %1417 = vmatpush.bf16.msra.mxu0 %v1394
        %1418 = vmatmul.bf16.gmra.mxu0 %v1360
        %v1419 = vpop.f32.mrf.mxu0
        %v1420 = vadd.f32 %v1347, %v1419
        %v1421 = vpop.f32.mrf.mxu0
        %v1422 = vadd.f32 %v1349, %v1421
        %1423 = vdwg.mxu0
        %v1424 = vld [vmem:[%s8] sm:$0x1]
        %v1426 = vperm.slane %v1424, 0
        %v1428 = vadd.f32 %v1420, %v1426
        %v1429 = vadd.f32 %v1422, %v1426
        %v1430 = vmax.f32 %v1428, 0.0
        %v1431 = vmax.f32 %v1429, 0.0
        %v1432 = vpack.c.bf16 %v1430, %v1430
        %v1433 = vpack.c.bf16 %v1431, %v1431
        %v1434 = vld [vmem:[#allocation5 + $0x8] sm:$0x8]
        %1435 = vst [vmem:[#allocation5] sm:$0x8] %v1434
        // Predicated region
        $region137: #{tpu_custom_call.1} parent=87 // pred_check
          %p1436 = pneg %p722
        $region138: #{tpu_custom_call.1} parent=87 // pred_check_branch
          %1438 = sbr.rel (%p1436) target = $region140
        $region139: #{tpu_custom_call.1} parent=87 // pred_region
          %1439 = vst [vmem:[#allocation5] sm:$0x8] 0
        $region140: #{tpu_custom_call.1} parent=87 // pred_fallthru
          _
        %1440 = vst [vmem:[#allocation5 + $0x4] sm:$0xf] %v1432
        %1441 = vst [vmem:[#allocation5 + $0x8] sm:$0xf] %v1433
        %v1442 = vld [vmem:[#allocation5] sm:$0x8]
        %v1443 = vld [vmem:[#allocation5 + $0x4] sm:$0xf]
        %v1444 = vld [vmem:[#allocation5 + $0x8] sm:$0x7]
        %v1445 = vld [vmem:[#allocation17] sm:$0xf]
        %v1446 = vld [vmem:[#allocation17 + $0x4] sm:$0xf]
        %v1447 = vld [vmem:[#allocation17 + $0x8] sm:$0xf]
        %v1448 = vld [vmem:[#allocation17 + $0xc] sm:$0xf]
        %v1449 = vld [vmem:[#allocation17 + $0x10] sm:$0xf]
        %v1450 = vld [vmem:[#allocation17 + $0x14] sm:$0xf]
        %v1451 = vld [vmem:[#allocation17 + $0x18] sm:$0xf]
        %v1452 = vld [vmem:[#allocation17 + $0x1c] sm:$0xf]
        %v1453 = vld [vmem:[#allocation17 + $0x20] sm:$0xf]
        %v1454 = vld [vmem:[#allocation17 + $0x24] sm:$0xf]
        %v1455 = vld [vmem:[#allocation17 + $0x28] sm:$0xf]
        %v1456 = vld [vmem:[#allocation17 + $0x2c] sm:$0xf]
        %v1457 = vld [vmem:[#allocation17 + $0x30] sm:$0xf]
        %v1458 = vld [vmem:[#allocation17 + $0x34] sm:$0xf]
        %v1459 = vld [vmem:[#allocation17 + $0x38] sm:$0xf]
        %v1460 = vld [vmem:[#allocation17 + $0x3c] sm:$0xf]
        %v1461 = vld [vmem:[#allocation5 + $0x8] sm:$0xf]
        %v1462 = vld [vmem:[#allocation17 + $0x40] sm:$0xf]
        %v1463 = vld [vmem:[#allocation17 + $0x44] sm:$0xf]
        %v1464 = vld [vmem:[#allocation17 + $0x48] sm:$0xf]
        %v1465 = vld [vmem:[#allocation17 + $0x4c] sm:$0xf]
        %v1466 = vld [vmem:[#allocation17 + $0x50] sm:$0xf]
        %v1467 = vld [vmem:[#allocation17 + $0x54] sm:$0xf]
        %v1468 = vld [vmem:[#allocation17 + $0x58] sm:$0xf]
        %v1469 = vld [vmem:[#allocation17 + $0x5c] sm:$0xf]
        %v1470 = vld [vmem:[#allocation17 + $0x60] sm:$0xf]
        %v1471 = vld [vmem:[#allocation17 + $0x64] sm:$0xf]
        %v1472 = vld [vmem:[#allocation17 + $0x68] sm:$0xf]
        %v1473 = vld [vmem:[#allocation17 + $0x6c] sm:$0xf]
        %v1474 = vld [vmem:[#allocation17 + $0x70] sm:$0xf]
        %v1475 = vld [vmem:[#allocation17 + $0x74] sm:$0xf]
        %v1476 = vld [vmem:[#allocation17 + $0x78] sm:$0xf]
        %v1477 = vld [vmem:[#allocation17 + $0x7c] sm:$0xf]
        %v1480 = vunpack.c.l.b16 %v1443
        %v1481 = vunpack.c.l.b16 %v1461
        %v1482 = vpack.c.b16 %v1481, %v1480
        %v1500 = vunpack.c.l.b16 %v1462
        %v1501 = vunpack.c.l.b16 %v1463
        %v1502 = vunpack.c.l.b16 %v1464
        %v1503 = vunpack.c.l.b16 %v1465
        %v1504 = vunpack.c.l.b16 %v1466
        %v1505 = vunpack.c.l.b16 %v1467
        %v1506 = vunpack.c.l.b16 %v1468
        %v1507 = vunpack.c.l.b16 %v1469
        %v1508 = vunpack.c.l.b16 %v1470
        %v1509 = vunpack.c.l.b16 %v1471
        %v1510 = vunpack.c.l.b16 %v1472
        %v1511 = vunpack.c.l.b16 %v1473
        %v1512 = vunpack.c.l.b16 %v1474
        %v1513 = vunpack.c.l.b16 %v1475
        %v1514 = vunpack.c.l.b16 %v1476
        %v1515 = vunpack.c.l.b16 %v1477
        %v1516 = vpack.c.b16 %v1501, %v1500
        %v1517 = vpack.c.b16 %v1503, %v1502
        %v1518 = vpack.c.b16 %v1505, %v1504
        %v1519 = vpack.c.b16 %v1507, %v1506
        %v1520 = vpack.c.b16 %v1509, %v1508
        %v1521 = vpack.c.b16 %v1511, %v1510
        %v1522 = vpack.c.b16 %v1513, %v1512
        %v1523 = vpack.c.b16 %v1515, %v1514
        %1532 = vmatpush.bf16.msra.mxu0 %v1523
        %1533 = vmatpush.bf16.msra.mxu0 %v1522
        %1534 = vmatpush.bf16.msra.mxu0 %v1521
        %1535 = vmatpush.bf16.msra.mxu0 %v1520
        %1536 = vmatpush.bf16.msra.mxu0 %v1519
        %1537 = vmatpush.bf16.msra.mxu0 %v1518
        %1538 = vmatpush.bf16.msra.mxu0 %v1517
        %1539 = vmatpush.bf16.msra.mxu0 %v1516
        %1540 = vmatmul.bf16.gmra.mxu0 %v1482
        %v1541 = vpop.f32.mrf.mxu0
        %v1542 = vadd.f32 0.0, %v1541
        %v1543 = vpop.f32.mrf.mxu0
        %v1544 = vadd.f32 0.0, %v1543
        %1545 = vdwg.mxu0
        %v1548 = vunpack.c.l.b16 %v1442
        %v1549 = vunpack.c.l.b16 %v1444
        %v1550 = vpack.c.b16 %v1480, %v1548
        %v1551 = vpack.c.b16 %v1549, %v1549
        %v1552 = vrot.slane %v1550, 3
        %v1553 = vrot.slane %v1551, 3
        %v1554 = vsel %vm1357, %v1552, %v1553
        %v1572 = vunpack.c.l.b16 %v1445
        %v1573 = vunpack.c.l.b16 %v1446
        %v1574 = vunpack.c.l.b16 %v1447
        %v1575 = vunpack.c.l.b16 %v1448
        %v1576 = vunpack.c.l.b16 %v1449
        %v1577 = vunpack.c.l.b16 %v1450
        %v1578 = vunpack.c.l.b16 %v1451
        %v1579 = vunpack.c.l.b16 %v1452
        %v1580 = vunpack.c.l.b16 %v1453
        %v1581 = vunpack.c.l.b16 %v1454
        %v1582 = vunpack.c.l.b16 %v1455
        %v1583 = vunpack.c.l.b16 %v1456
        %v1584 = vunpack.c.l.b16 %v1457
        %v1585 = vunpack.c.l.b16 %v1458
        %v1586 = vunpack.c.l.b16 %v1459
        %v1587 = vunpack.c.l.b16 %v1460
        %v1588 = vpack.c.b16 %v1573, %v1572
        %v1589 = vpack.c.b16 %v1575, %v1574
        %v1590 = vpack.c.b16 %v1577, %v1576
        %v1591 = vpack.c.b16 %v1579, %v1578
        %v1592 = vpack.c.b16 %v1581, %v1580
        %v1593 = vpack.c.b16 %v1583, %v1582
        %v1594 = vpack.c.b16 %v1585, %v1584
        %v1595 = vpack.c.b16 %v1587, %v1586
        %1604 = vmatpush.bf16.msra.mxu0 %v1595
        %1605 = vmatpush.bf16.msra.mxu0 %v1594
        %1606 = vmatpush.bf16.msra.mxu0 %v1593
        %1607 = vmatpush.bf16.msra.mxu0 %v1592
        %1608 = vmatpush.bf16.msra.mxu0 %v1591
        %1609 = vmatpush.bf16.msra.mxu0 %v1590
        %1610 = vmatpush.bf16.msra.mxu0 %v1589
        %1611 = vmatpush.bf16.msra.mxu0 %v1588
        %1612 = vmatmul.bf16.gmra.mxu0 %v1554
        %v1613 = vpop.f32.mrf.mxu0
        %v1614 = vadd.f32 %v1542, %v1613
        %v1615 = vpop.f32.mrf.mxu0
        %v1616 = vadd.f32 %v1544, %v1615
        %1617 = vdwg.mxu0
        %v1618 = vld [vmem:[%s10] sm:$0x1]
        %v1620 = vperm.slane %v1618, 0
        %v1622 = vadd.f32 %v1614, %v1620
        %v1623 = vadd.f32 %v1616, %v1620
        %v1624 = vmax.f32 %v1622, 0.0
        %v1625 = vmax.f32 %v1623, 0.0
        %v1626 = vadd.f32 %v1624, %v1235
        %v1627 = vadd.f32 %v1625, %v1236
        %v1628 = vmax.f32 %v1626, 0.0
        %v1629 = vmax.f32 %v1627, 0.0
        %v1630 = vpack.c.bf16 %v1628, %v1628
        %v1631 = vpack.c.bf16 %v1629, %v1629
        %v1632 = vld [vmem:[#allocation6 + $0x8] sm:$0xc]
        %1633 = vst [vmem:[#allocation6] sm:$0xc] %v1632
        // Predicated region
        $region141: #{tpu_custom_call.1} parent=87 // pred_check
          %p1634 = pneg %p722
        $region142: #{tpu_custom_call.1} parent=87 // pred_check_branch
          %1636 = sbr.rel (%p1634) target = $region144
        $region143: #{tpu_custom_call.1} parent=87 // pred_region
          %1637 = vst [vmem:[#allocation6] sm:$0xc] 0
        $region144: #{tpu_custom_call.1} parent=87 // pred_fallthru
          _
        %1638 = vst [vmem:[#allocation6 + $0x4] sm:$0xf] %v1630
        %1639 = vst [vmem:[#allocation6 + $0x8] sm:$0xf] %v1631
        %v1640 = vld [vmem:[#allocation6] sm:$0xc]
        %v1641 = vld [vmem:[#allocation6 + $0x4] sm:$0xf]
        %v1642 = vld [vmem:[#allocation6 + $0x8] sm:$0x3]
        %v1643 = vld [vmem:[#allocation19] sm:$0xf]
        %v1644 = vld [vmem:[#allocation19 + $0x4] sm:$0xf]
        %v1645 = vld [vmem:[#allocation19 + $0x8] sm:$0xf]
        %v1646 = vld [vmem:[#allocation19 + $0xc] sm:$0xf]
        %v1647 = vld [vmem:[#allocation19 + $0x10] sm:$0xf]
        %v1648 = vld [vmem:[#allocation19 + $0x14] sm:$0xf]
        %v1649 = vld [vmem:[#allocation19 + $0x18] sm:$0xf]
        %v1650 = vld [vmem:[#allocation19 + $0x1c] sm:$0xf]
        %v1651 = vld [vmem:[#allocation19 + $0x20] sm:$0xf]
        %v1652 = vld [vmem:[#allocation19 + $0x24] sm:$0xf]
        %v1653 = vld [vmem:[#allocation19 + $0x28] sm:$0xf]
        %v1654 = vld [vmem:[#allocation19 + $0x2c] sm:$0xf]
        %v1655 = vld [vmem:[#allocation19 + $0x30] sm:$0xf]
        %v1656 = vld [vmem:[#allocation19 + $0x34] sm:$0xf]
        %v1657 = vld [vmem:[#allocation19 + $0x38] sm:$0xf]
        %v1658 = vld [vmem:[#allocation19 + $0x3c] sm:$0xf]
        %v1659 = vld [vmem:[#allocation6 + $0x8] sm:$0xf]
        %v1660 = vld [vmem:[#allocation19 + $0x40] sm:$0xf]
        %v1661 = vld [vmem:[#allocation19 + $0x44] sm:$0xf]
        %v1662 = vld [vmem:[#allocation19 + $0x48] sm:$0xf]
        %v1663 = vld [vmem:[#allocation19 + $0x4c] sm:$0xf]
        %v1664 = vld [vmem:[#allocation19 + $0x50] sm:$0xf]
        %v1665 = vld [vmem:[#allocation19 + $0x54] sm:$0xf]
        %v1666 = vld [vmem:[#allocation19 + $0x58] sm:$0xf]
        %v1667 = vld [vmem:[#allocation19 + $0x5c] sm:$0xf]
        %v1668 = vld [vmem:[#allocation19 + $0x60] sm:$0xf]
        %v1669 = vld [vmem:[#allocation19 + $0x64] sm:$0xf]
        %v1670 = vld [vmem:[#allocation19 + $0x68] sm:$0xf]
        %v1671 = vld [vmem:[#allocation19 + $0x6c] sm:$0xf]
        %v1672 = vld [vmem:[#allocation19 + $0x70] sm:$0xf]
        %v1673 = vld [vmem:[#allocation19 + $0x74] sm:$0xf]
        %v1674 = vld [vmem:[#allocation19 + $0x78] sm:$0xf]
        %v1675 = vld [vmem:[#allocation19 + $0x7c] sm:$0xf]
        %v1678 = vunpack.c.l.b16 %v1641
        %v1679 = vunpack.c.l.b16 %v1659
        %v1680 = vpack.c.b16 %v1679, %v1678
        %v1698 = vunpack.c.l.b16 %v1660
        %v1699 = vunpack.c.l.b16 %v1661
        %v1700 = vunpack.c.l.b16 %v1662
        %v1701 = vunpack.c.l.b16 %v1663
        %v1702 = vunpack.c.l.b16 %v1664
        %v1703 = vunpack.c.l.b16 %v1665
        %v1704 = vunpack.c.l.b16 %v1666
        %v1705 = vunpack.c.l.b16 %v1667
        %v1706 = vunpack.c.l.b16 %v1668
        %v1707 = vunpack.c.l.b16 %v1669
        %v1708 = vunpack.c.l.b16 %v1670
        %v1709 = vunpack.c.l.b16 %v1671
        %v1710 = vunpack.c.l.b16 %v1672
        %v1711 = vunpack.c.l.b16 %v1673
        %v1712 = vunpack.c.l.b16 %v1674
        %v1713 = vunpack.c.l.b16 %v1675
        %v1714 = vpack.c.b16 %v1699, %v1698
        %v1715 = vpack.c.b16 %v1701, %v1700
        %v1716 = vpack.c.b16 %v1703, %v1702
        %v1717 = vpack.c.b16 %v1705, %v1704
        %v1718 = vpack.c.b16 %v1707, %v1706
        %v1719 = vpack.c.b16 %v1709, %v1708
        %v1720 = vpack.c.b16 %v1711, %v1710
        %v1721 = vpack.c.b16 %v1713, %v1712
        %1730 = vmatpush.bf16.msra.mxu0 %v1721
        %1731 = vmatpush.bf16.msra.mxu0 %v1720
        %1732 = vmatpush.bf16.msra.mxu0 %v1719
        %1733 = vmatpush.bf16.msra.mxu0 %v1718
        %1734 = vmatpush.bf16.msra.mxu0 %v1717
        %1735 = vmatpush.bf16.msra.mxu0 %v1716
        %1736 = vmatpush.bf16.msra.mxu0 %v1715
        %1737 = vmatpush.bf16.msra.mxu0 %v1714
        %1738 = vmatmul.bf16.gmra.mxu0 %v1680
        %v1739 = vpop.f32.mrf.mxu0
        %v1740 = vadd.f32 0.0, %v1739
        %v1741 = vpop.f32.mrf.mxu0
        %v1742 = vadd.f32 0.0, %v1741
        %1743 = vdwg.mxu0
        %v1746 = vunpack.c.l.b16 %v1640
        %v1747 = vunpack.c.l.b16 %v1642
        %v1748 = vpack.c.b16 %v1678, %v1746
        %v1749 = vpack.c.b16 %v1747, %v1747
        %vm1750 = vcmask 1045504
        %v1751 = vrot.slane %v1748, 2
        %v1752 = vrot.slane %v1749, 2
        %v1753 = vsel %vm1750, %v1751, %v1752
        %v1771 = vunpack.c.l.b16 %v1643
        %v1772 = vunpack.c.l.b16 %v1644
        %v1773 = vunpack.c.l.b16 %v1645
        %v1774 = vunpack.c.l.b16 %v1646
        %v1775 = vunpack.c.l.b16 %v1647
        %v1776 = vunpack.c.l.b16 %v1648
        %v1777 = vunpack.c.l.b16 %v1649
        %v1778 = vunpack.c.l.b16 %v1650
        %v1779 = vunpack.c.l.b16 %v1651
        %v1780 = vunpack.c.l.b16 %v1652
        %v1781 = vunpack.c.l.b16 %v1653
        %v1782 = vunpack.c.l.b16 %v1654
        %v1783 = vunpack.c.l.b16 %v1655
        %v1784 = vunpack.c.l.b16 %v1656
        %v1785 = vunpack.c.l.b16 %v1657
        %v1786 = vunpack.c.l.b16 %v1658
        %v1787 = vpack.c.b16 %v1772, %v1771
        %v1788 = vpack.c.b16 %v1774, %v1773
        %v1789 = vpack.c.b16 %v1776, %v1775
        %v1790 = vpack.c.b16 %v1778, %v1777
        %v1791 = vpack.c.b16 %v1780, %v1779
        %v1792 = vpack.c.b16 %v1782, %v1781
        %v1793 = vpack.c.b16 %v1784, %v1783
        %v1794 = vpack.c.b16 %v1786, %v1785
        %1803 = vmatpush.bf16.msra.mxu0 %v1794
        %1804 = vmatpush.bf16.msra.mxu0 %v1793
        %1805 = vmatpush.bf16.msra.mxu0 %v1792
        %1806 = vmatpush.bf16.msra.mxu0 %v1791
        %1807 = vmatpush.bf16.msra.mxu0 %v1790
        %1808 = vmatpush.bf16.msra.mxu0 %v1789
        %1809 = vmatpush.bf16.msra.mxu0 %v1788
        %1810 = vmatpush.bf16.msra.mxu0 %v1787
        %1811 = vmatmul.bf16.gmra.mxu0 %v1753
        %v1812 = vpop.f32.mrf.mxu0
        %v1813 = vadd.f32 %v1740, %v1812
        %v1814 = vpop.f32.mrf.mxu0
        %v1815 = vadd.f32 %v1742, %v1814
        %1816 = vdwg.mxu0
        %v1817 = vld [vmem:[%s12] sm:$0x1]
        %v1819 = vperm.slane %v1817, 0
        %v1821 = vadd.f32 %v1813, %v1819
        %v1822 = vadd.f32 %v1815, %v1819
        %v1823 = vmax.f32 %v1821, 0.0
        %v1824 = vmax.f32 %v1822, 0.0
        %v1825 = vpack.c.bf16 %v1823, %v1823
        %v1826 = vpack.c.bf16 %v1824, %v1824
        %v1827 = vld [vmem:[#allocation7 + $0x8] sm:$0xc]
        %1828 = vst [vmem:[#allocation7] sm:$0xc] %v1827
        // Predicated region
        $region145: #{tpu_custom_call.1} parent=87 // pred_check
          %p1829 = pneg %p722
        $region146: #{tpu_custom_call.1} parent=87 // pred_check_branch
          %1831 = sbr.rel (%p1829) target = $region148
        $region147: #{tpu_custom_call.1} parent=87 // pred_region
          %1832 = vst [vmem:[#allocation7] sm:$0xc] 0
        $region148: #{tpu_custom_call.1} parent=87 // pred_fallthru
          _
        %1833 = vst [vmem:[#allocation7 + $0x4] sm:$0xf] %v1825
        %1834 = vst [vmem:[#allocation7 + $0x8] sm:$0xf] %v1826
        %v1835 = vld [vmem:[#allocation7] sm:$0xc]
        %v1836 = vld [vmem:[#allocation7 + $0x4] sm:$0xf]
        %v1837 = vld [vmem:[#allocation7 + $0x8] sm:$0x3]
        %v1838 = vld [vmem:[#allocation20] sm:$0xf]
        %v1839 = vld [vmem:[#allocation20 + $0x4] sm:$0xf]
        %v1840 = vld [vmem:[#allocation20 + $0x8] sm:$0xf]
        %v1841 = vld [vmem:[#allocation20 + $0xc] sm:$0xf]
        %v1842 = vld [vmem:[#allocation20 + $0x10] sm:$0xf]
        %v1843 = vld [vmem:[#allocation20 + $0x14] sm:$0xf]
        %v1844 = vld [vmem:[#allocation20 + $0x18] sm:$0xf]
        %v1845 = vld [vmem:[#allocation20 + $0x1c] sm:$0xf]
        %v1846 = vld [vmem:[#allocation20 + $0x20] sm:$0xf]
        %v1847 = vld [vmem:[#allocation20 + $0x24] sm:$0xf]
        %v1848 = vld [vmem:[#allocation20 + $0x28] sm:$0xf]
        %v1849 = vld [vmem:[#allocation20 + $0x2c] sm:$0xf]
        %v1850 = vld [vmem:[#allocation20 + $0x30] sm:$0xf]
        %v1851 = vld [vmem:[#allocation20 + $0x34] sm:$0xf]
        %v1852 = vld [vmem:[#allocation20 + $0x38] sm:$0xf]
        %v1853 = vld [vmem:[#allocation20 + $0x3c] sm:$0xf]
        %v1854 = vld [vmem:[#allocation7 + $0x8] sm:$0xf]
        %v1855 = vld [vmem:[#allocation20 + $0x40] sm:$0xf]
        %v1856 = vld [vmem:[#allocation20 + $0x44] sm:$0xf]
        %v1857 = vld [vmem:[#allocation20 + $0x48] sm:$0xf]
        %v1858 = vld [vmem:[#allocation20 + $0x4c] sm:$0xf]
        %v1859 = vld [vmem:[#allocation20 + $0x50] sm:$0xf]
        %v1860 = vld [vmem:[#allocation20 + $0x54] sm:$0xf]
        %v1861 = vld [vmem:[#allocation20 + $0x58] sm:$0xf]
        %v1862 = vld [vmem:[#allocation20 + $0x5c] sm:$0xf]
        %v1863 = vld [vmem:[#allocation20 + $0x60] sm:$0xf]
        %v1864 = vld [vmem:[#allocation20 + $0x64] sm:$0xf]
        %v1865 = vld [vmem:[#allocation20 + $0x68] sm:$0xf]
        %v1866 = vld [vmem:[#allocation20 + $0x6c] sm:$0xf]
        %v1867 = vld [vmem:[#allocation20 + $0x70] sm:$0xf]
        %v1868 = vld [vmem:[#allocation20 + $0x74] sm:$0xf]
        %v1869 = vld [vmem:[#allocation20 + $0x78] sm:$0xf]
        %v1870 = vld [vmem:[#allocation20 + $0x7c] sm:$0xf]
        %v1873 = vunpack.c.l.b16 %v1836
        %v1874 = vunpack.c.l.b16 %v1854
        %v1875 = vpack.c.b16 %v1874, %v1873
        %v1893 = vunpack.c.l.b16 %v1855
        %v1894 = vunpack.c.l.b16 %v1856
        %v1895 = vunpack.c.l.b16 %v1857
        %v1896 = vunpack.c.l.b16 %v1858
        %v1897 = vunpack.c.l.b16 %v1859
        %v1898 = vunpack.c.l.b16 %v1860
        %v1899 = vunpack.c.l.b16 %v1861
        %v1900 = vunpack.c.l.b16 %v1862
        %v1901 = vunpack.c.l.b16 %v1863
        %v1902 = vunpack.c.l.b16 %v1864
        %v1903 = vunpack.c.l.b16 %v1865
        %v1904 = vunpack.c.l.b16 %v1866
        %v1905 = vunpack.c.l.b16 %v1867
        %v1906 = vunpack.c.l.b16 %v1868
        %v1907 = vunpack.c.l.b16 %v1869
        %v1908 = vunpack.c.l.b16 %v1870
        %v1909 = vpack.c.b16 %v1894, %v1893
        %v1910 = vpack.c.b16 %v1896, %v1895
        %v1911 = vpack.c.b16 %v1898, %v1897
        %v1912 = vpack.c.b16 %v1900, %v1899
        %v1913 = vpack.c.b16 %v1902, %v1901
        %v1914 = vpack.c.b16 %v1904, %v1903
        %v1915 = vpack.c.b16 %v1906, %v1905
        %v1916 = vpack.c.b16 %v1908, %v1907
        %1925 = vmatpush.bf16.msra.mxu0 %v1916
        %1926 = vmatpush.bf16.msra.mxu0 %v1915
        %1927 = vmatpush.bf16.msra.mxu0 %v1914
        %1928 = vmatpush.bf16.msra.mxu0 %v1913
        %1929 = vmatpush.bf16.msra.mxu0 %v1912
        %1930 = vmatpush.bf16.msra.mxu0 %v1911
        %1931 = vmatpush.bf16.msra.mxu0 %v1910
        %1932 = vmatpush.bf16.msra.mxu0 %v1909
        %1933 = vmatmul.bf16.gmra.mxu0 %v1875
        %v1934 = vpop.f32.mrf.mxu0
        %v1935 = vadd.f32 0.0, %v1934
        %v1936 = vpop.f32.mrf.mxu0
        %v1937 = vadd.f32 0.0, %v1936
        %1938 = vdwg.mxu0
        %v1941 = vunpack.c.l.b16 %v1835
        %v1942 = vunpack.c.l.b16 %v1837
        %v1943 = vpack.c.b16 %v1873, %v1941
        %v1944 = vpack.c.b16 %v1942, %v1942
        %v1945 = vrot.slane %v1943, 2
        %v1946 = vrot.slane %v1944, 2
        %v1947 = vsel %vm1750, %v1945, %v1946
        %v1965 = vunpack.c.l.b16 %v1838
        %v1966 = vunpack.c.l.b16 %v1839
        %v1967 = vunpack.c.l.b16 %v1840
        %v1968 = vunpack.c.l.b16 %v1841
        %v1969 = vunpack.c.l.b16 %v1842
        %v1970 = vunpack.c.l.b16 %v1843
        %v1971 = vunpack.c.l.b16 %v1844
        %v1972 = vunpack.c.l.b16 %v1845
        %v1973 = vunpack.c.l.b16 %v1846
        %v1974 = vunpack.c.l.b16 %v1847
        %v1975 = vunpack.c.l.b16 %v1848
        %v1976 = vunpack.c.l.b16 %v1849
        %v1977 = vunpack.c.l.b16 %v1850
        %v1978 = vunpack.c.l.b16 %v1851
        %v1979 = vunpack.c.l.b16 %v1852
        %v1980 = vunpack.c.l.b16 %v1853
        %v1981 = vpack.c.b16 %v1966, %v1965
        %v1982 = vpack.c.b16 %v1968, %v1967
        %v1983 = vpack.c.b16 %v1970, %v1969
        %v1984 = vpack.c.b16 %v1972, %v1971
        %v1985 = vpack.c.b16 %v1974, %v1973
        %v1986 = vpack.c.b16 %v1976, %v1975
        %v1987 = vpack.c.b16 %v1978, %v1977
        %v1988 = vpack.c.b16 %v1980, %v1979
        %1997 = vmatpush.bf16.msra.mxu0 %v1988
        %1998 = vmatpush.bf16.msra.mxu0 %v1987
        %1999 = vmatpush.bf16.msra.mxu0 %v1986
        %2000 = vmatpush.bf16.msra.mxu0 %v1985
        %2001 = vmatpush.bf16.msra.mxu0 %v1984
        %2002 = vmatpush.bf16.msra.mxu0 %v1983
        %2003 = vmatpush.bf16.msra.mxu0 %v1982
        %2004 = vmatpush.bf16.msra.mxu0 %v1981
        %2005 = vmatmul.bf16.gmra.mxu0 %v1947
        %v2006 = vpop.f32.mrf.mxu0
        %v2007 = vadd.f32 %v1935, %v2006
        %v2008 = vpop.f32.mrf.mxu0
        %v2009 = vadd.f32 %v1937, %v2008
        %2010 = vdwg.mxu0
        %v2011 = vld [vmem:[%s14] sm:$0x1]
        %v2013 = vperm.slane %v2011, 0
        %v2015 = vadd.f32 %v2007, %v2013
        %v2016 = vadd.f32 %v2009, %v2013
        %v2017 = vmax.f32 %v2015, 0.0
        %v2018 = vmax.f32 %v2016, 0.0
        %v2019 = vld [vmem:[#allocation22] sm:$0xf]
        %v2020 = vld [vmem:[#allocation22 + $0x4] sm:$0xf]
        %v2021 = vld [vmem:[#allocation22 + $0x8] sm:$0xf]
        %v2022 = vld [vmem:[#allocation22 + $0xc] sm:$0xf]
        %v2023 = vld [vmem:[#allocation22 + $0x10] sm:$0xf]
        %v2024 = vld [vmem:[#allocation22 + $0x14] sm:$0xf]
        %v2025 = vld [vmem:[#allocation22 + $0x18] sm:$0xf]
        %v2026 = vld [vmem:[#allocation22 + $0x1c] sm:$0xf]
        %v2027 = vld [vmem:[#allocation22 + $0x20] sm:$0xf]
        %v2028 = vld [vmem:[#allocation22 + $0x24] sm:$0xf]
        %v2029 = vld [vmem:[#allocation22 + $0x28] sm:$0xf]
        %v2030 = vld [vmem:[#allocation22 + $0x2c] sm:$0xf]
        %v2031 = vld [vmem:[#allocation22 + $0x30] sm:$0xf]
        %v2032 = vld [vmem:[#allocation22 + $0x34] sm:$0xf]
        %v2033 = vld [vmem:[#allocation22 + $0x38] sm:$0xf]
        %v2034 = vld [vmem:[#allocation22 + $0x3c] sm:$0xf]
        %v2035 = vld [vmem:[%s16] sm:$0x1]
        %v2037 = vperm.slane %v2035, 0
        %v2041 = vunpack.c.l.b16 %v1630
        %v2042 = vunpack.c.l.b16 %v1631
        %v2043 = vpack.c.b16 %v2042, %v2041
        %v2061 = vunpack.c.l.b16 %v2019
        %v2062 = vunpack.c.l.b16 %v2020
        %v2063 = vunpack.c.l.b16 %v2021
        %v2064 = vunpack.c.l.b16 %v2022
        %v2065 = vunpack.c.l.b16 %v2023
        %v2066 = vunpack.c.l.b16 %v2024
        %v2067 = vunpack.c.l.b16 %v2025
        %v2068 = vunpack.c.l.b16 %v2026
        %v2069 = vunpack.c.l.b16 %v2027
        %v2070 = vunpack.c.l.b16 %v2028
        %v2071 = vunpack.c.l.b16 %v2029
        %v2072 = vunpack.c.l.b16 %v2030
        %v2073 = vunpack.c.l.b16 %v2031
        %v2074 = vunpack.c.l.b16 %v2032
        %v2075 = vunpack.c.l.b16 %v2033
        %v2076 = vunpack.c.l.b16 %v2034
        %v2077 = vpack.c.b16 %v2062, %v2061
        %v2078 = vpack.c.b16 %v2064, %v2063
        %v2079 = vpack.c.b16 %v2066, %v2065
        %v2080 = vpack.c.b16 %v2068, %v2067
        %v2081 = vpack.c.b16 %v2070, %v2069
        %v2082 = vpack.c.b16 %v2072, %v2071
        %v2083 = vpack.c.b16 %v2074, %v2073
        %v2084 = vpack.c.b16 %v2076, %v2075
        %2093 = vmatpush.bf16.msra.mxu0 %v2084
        %2094 = vmatpush.bf16.msra.mxu0 %v2083
        %2095 = vmatpush.bf16.msra.mxu0 %v2082
        %2096 = vmatpush.bf16.msra.mxu0 %v2081
        %2097 = vmatpush.bf16.msra.mxu0 %v2080
        %2098 = vmatpush.bf16.msra.mxu0 %v2079
        %2099 = vmatpush.bf16.msra.mxu0 %v2078
        %2100 = vmatpush.bf16.msra.mxu0 %v2077
        %2101 = vmatmul.bf16.gmra.mxu0 %v2043
        %v2102 = vpop.f32.mrf.mxu0
        %v2103 = vadd.f32 %v2037, %v2102
        %v2104 = vpop.f32.mrf.mxu0
        %v2105 = vadd.f32 %v2037, %v2104
        %2106 = vdwg.mxu0
        %v2107 = vadd.f32 %v2017, %v2103
        %v2108 = vadd.f32 %v2018, %v2105
        %v2109 = vmax.f32 %v2107, 0.0
        %v2110 = vmax.f32 %v2108, 0.0
        %2111 = vst [vmem:[%s718] sm:$0xff] %v2109
        %2112 = vst [vmem:[%s718 + $0x8] sm:$0xff] %v2110
        %s2113 = sand.u32 %s424, 1
        %s2114 = scalar_lea.sflag [#allocation10], %s2113
        %s2115 = sand.u32 %s424, 1
        %s2116 = smul.addr %s2115, 16
        %s2117 = scalar_lea.vmem [#allocation23], %s2116
        // Predicated region
        $region149: #{tpu_custom_call.1} parent=87 // pred_check
          %p2118 = pneg %p434
        $region150: #{tpu_custom_call.1} parent=87 // pred_check_branch
          %2120 = sbr.rel (%p2118) target = $region152
        $region151: #{tpu_custom_call.1} parent=87 // pred_region
          %s2121 = smul.u32 2, %s43
          %2123 = vsyncadd %s2114, 0
          %s2124 = smul.addr %s42, 2
          %s2125 = sadd.s32 %s2121, %s2124
          %s2126 = smul.addr %s2125, 8
          %s2127 = scalar_lea.hbm %s17, %s2126
          %s2128 = sshll.u32 %s2117, 4
          %s2129 = int_to_ptr.vmem [resolvable:$true] %s2128
          %s2130 = sshll.u32 %s2127, 4
          %s2131 = int_to_ptr.hbm [resolvable:$true] %s2130
          %2136 = dma.vmem_to_hbm [thread:$0]  %s2129, 256, %s2131, %s2114, 128, 128, 8
        $region152: #{tpu_custom_call.1} parent=87 // pred_fallthru
          _
      $region88: #{tpu_custom_call.1} parent=5 // pred_fallthru
        _
      %p2137 = scmp.le.s32.totalorder 2, %s33
      // Predicated region
      $region153: #{tpu_custom_call.1} parent=5 // pred_check
        %p2138 = pneg %p2137
      $region154: #{tpu_custom_call.1} parent=5 // pred_check_branch
        %2140 = sbr.rel (%p2138) target = $region156
      $region155: #{tpu_custom_call.1} parent=5 // pred_region
        %s2141 = ssub.s32 %s33, 2
        // Predicated region
        $region157: #{tpu_custom_call.1} parent=155 // pred_check
          %p2142 = pneg %p440
        $region158: #{tpu_custom_call.1} parent=155 // pred_check_branch
          %2144 = sbr.rel (%p2142) target = $region160
        $region159: #{tpu_custom_call.1} parent=155 // pred_region
          %s2145 = sand.u32 %s425, 1
          %s2146 = scalar_lea.sflag [#allocation10], %s2145
          %s2147 = sand.u32 %s425, 1
          %s2148 = smul.addr %s2147, 16
          %s2149 = scalar_lea.vmem [#allocation23], %s2148
          %2151 = dma.done %s2146, 256
        $region160: #{tpu_custom_call.1} parent=155 // pred_fallthru
          _
      $region156: #{tpu_custom_call.1} parent=5 // pred_fallthru
        _
    $region6: #{tpu_custom_call.1} parent=1 // loop_footer
      %s37 = sadd.s32 1, %s33
    $region7: #{tpu_custom_call.1} parent=1 // loop_footer_branch
      %32 = sbr.rel target = $region3
    $region8: #{tpu_custom_call.1} parent=1 // loop_exit
      _
    %2152 = vsyncpa [#allocation9], 1
    %s2153 = scalar_lea.sflag [#allocation9], 1
    %2154 = vsyncpa %s2153, 1
    %2155 = vsyncpa [#allocation12], 1
    %2156 = vsyncpa [#allocation15], 1
    %2157 = vsyncpa [#allocation18], 1
    %2158 = vsyncpa [#allocation21], 1
    %2159 = vsyncpa [#allocation10], 1
    %s2160 = scalar_lea.sflag [#allocation10], 1
    %2161 = vsyncpa %s2160, 1

</llo_original>
